<compile_context>
chip_gen: v7x
topology: tpu7x:2x2x1
jax: 0.10.0
libtpu: 0.0.40
codegen_flags: <defaults>
</compile_context>

<pallas_src>
import functools

import jax
import jax.numpy as jnp
from jax.experimental import pallas as pl
from jax.experimental.pallas import tpu as pltpu


# ----------------------------------------------------------------------------
# Generic M-tiled matmul + bias + activation (used for the expand 1x1 conv)
# ----------------------------------------------------------------------------

def _matmul_bias_act_kernel(x_ref, w_ref, b_ref, o_ref, *, act):
    """One M-tile of  o = act(x @ w + b)  (bf16 in, f32 accumulate)."""
    acc = jnp.dot(x_ref[...], w_ref[...], preferred_element_type=jnp.float32)
    acc = acc + b_ref[...]                       # (1, N) f32 broadcasts over rows
    if act == "relu6":
        acc = jnp.clip(acc, 0.0, 6.0)
    o_ref[...] = acc.astype(o_ref.dtype)


def matmul_bias_act(x, w, b, act=None, tm=256):
    """y = act(x @ w + b); x:(M,K) w:(K,N) b:(N,). Tiled over M, bf16-fed MXU,
    weights stay VMEM-resident across M tiles."""
    M, K = x.shape
    K2, N = w.shape
    assert K == K2
    tm = min(tm, M)
    while M % tm:
        tm //= 2
    if tm % 8 and tm != M:                       # respect the (8,128) tiling rule
        tm = M
    return pl.pallas_call(
        functools.partial(_matmul_bias_act_kernel, act=act),
        out_shape=jax.ShapeDtypeStruct((M, N), jnp.bfloat16),
        grid=(M // tm,),
        in_specs=[
            pl.BlockSpec((tm, K), lambda i: (i, 0)),
            pl.BlockSpec((K, N), lambda i: (0, 0)),   # resident across M tiles
            pl.BlockSpec((1, N), lambda i: (0, 0)),
        ],
        out_specs=pl.BlockSpec((tm, N), lambda i: (i, 0)),
        compiler_params=pltpu.CompilerParams(dimension_semantics=("parallel",)),
        # TODO(synk): also tile K/N (pl.when-initialized f32 accumulator) once
        #             channel counts exceed a single VMEM-resident block.
    )(x.astype(jnp.bfloat16), w.astype(jnp.bfloat16),
      b.reshape(1, N).astype(jnp.float32))


# ----------------------------------------------------------------------------
# Stem: 3x3 stride-2 conv + ReLU6 via space-to-depth (no HBM im2col)
# ----------------------------------------------------------------------------

def _stem_conv_kernel(x_ref, w_ref, b_ref, o_ref, *, offsets, n_rows):
    """Stride-2 3x3 conv (space-to-depth form) + bias + ReLU6 for one image.

    x_ref : (1, Np, 4*Cin)   flattened space-to-depth rows (+1 spare row)
    w_ref : (4, 4*Cin, Cout) one K-slab per 2x2 shifted view
    o_ref : (1, Ho*(Wo+1), Cout)  (phantom column dropped by the wrapper)
    """
    x = x_ref[0]
    cout = o_ref.shape[-1]
    acc = jnp.zeros((n_rows, cout), jnp.float32)
    for idx, off in enumerate(offsets):
        acc = acc + jnp.dot(x[off:off + n_rows, :], w_ref[idx],
                            preferred_element_type=jnp.float32)
    acc = jnp.clip(acc + b_ref[...], 0.0, 6.0)
    o_ref[...] = acc[None].astype(o_ref.dtype)


def stem_conv_s2d(x, w_s2d, b):
    """3x3 stride-2 'same' conv + ReLU6. x:(B,H,W,Cin) NHWC -> (B,H/2,W/2,Cout)."""
    B, H, W, Cin = x.shape
    assert H % 2 == 0 and W % 2 == 0
    Ho, Wo = H // 2, W // 2
    Cout = w_s2d.shape[-1]
    # Space-to-depth: same byte count as the padded input (no 9x im2col copy);
    # the stride-2 3x3 conv becomes a stride-1 2x2 conv over 4*Cin channels.
    xp = jnp.pad(x, ((0, 0), (1, 1), (1, 1), (0, 0)))
    xs = xp.reshape(B, Ho + 1, 2, Wo + 1, 2, Cin)
    xs = jnp.transpose(xs, (0, 1, 3, 2, 4, 5)).reshape(
        B, (Ho + 1) * (Wo + 1), 4 * Cin)
    xs = jnp.pad(xs, ((0, 0), (0, 1), (0, 0)))   # spare row for the last shifted view
    Np = xs.shape[1]
    n_rows = Ho * (Wo + 1)
    offsets = (0, 1, Wo + 1, Wo + 2)             # (di, dj) in {0,1}^2, row-major
    out = pl.pallas_call(
        functools.partial(_stem_conv_kernel, offsets=offsets, n_rows=n_rows),
        out_shape=jax.ShapeDtypeStruct((B, n_rows, Cout), jnp.bfloat16),
        grid=(B,),
        in_specs=[
            pl.BlockSpec((1, Np, 4 * Cin), lambda bi: (bi, 0, 0)),
            pl.BlockSpec((4, 4 * Cin, Cout), lambda bi: (0, 0, 0)),
            pl.BlockSpec((1, Cout), lambda bi: (0, 0)),
        ],
        out_specs=pl.BlockSpec((1, n_rows, Cout), lambda bi: (bi, 0, 0)),
        compiler_params=pltpu.CompilerParams(dimension_semantics=("parallel",)),
    )(xs.astype(jnp.bfloat16), w_s2d.astype(jnp.bfloat16),
      b.reshape(1, Cout).astype(jnp.float32))
    # Drop the phantom Wo-th output column introduced by the flattened views.
    return out.reshape(B, Ho, Wo + 1, Cout)[:, :, :Wo, :]


def stem_weight_s2d(w3):
    """(3,3,cin,cout) conv weight -> (4, 4*cin, cout) space-to-depth layout."""
    _, _, cin, cout = w3.shape
    w4 = jnp.zeros((4, 4, cin, cout), w3.dtype).at[:3, :3].set(w3)
    w4 = w4.reshape(2, 2, 2, 2, cin, cout)       # (di, p, dj, q, cin, cout)
    w4 = jnp.transpose(w4, (0, 2, 1, 3, 4, 5))   # (di, dj, p, q, cin, cout)
    return w4.reshape(4, 4 * cin, cout)


# ----------------------------------------------------------------------------
# Depthwise 3x3 + ReLU6 (VPU; lane-dense 128-channel blocks)
# ----------------------------------------------------------------------------

def _dw3x3_relu6_kernel(x_ref, w_ref, b_ref, o_ref):
    """3x3 depthwise conv (stride 1, pre-padded) + bias + ReLU6 (f32 VPU math)."""
    _, H, W, C = o_ref.shape
    x = x_ref[0].astype(jnp.float32)             # (H+2, W+2, C)
    acc = jnp.zeros((H, W, C), jnp.float32)
    for kh in range(3):
        for kw in range(3):
            acc = acc + x[kh:kh + H, kw:kw + W, :] * w_ref[kh * 3 + kw, :]
    acc = jnp.clip(acc + b_ref[0, :], 0.0, 6.0)
    o_ref[...] = acc[None].astype(o_ref.dtype)


def depthwise3x3_relu6(x, w, b):
    """x:(B,H,W,C) NHWC bf16, w:(3,3,C), b:(C,) -> (B,H,W,C) bf16."""
    B, H, W, C = x.shape
    xp = jnp.pad(x.astype(jnp.bfloat16), ((0, 0), (1, 1), (1, 1), (0, 0)))
    cb = 128 if C % 128 == 0 else C              # lane-dense channel blocks
    # TODO(synk): at real frame sizes this also needs H-row tiling with halo
    #             rows (manual make_async_copy); full frames fit VMEM here.
    return pl.pallas_call(
        _dw3x3_relu6_kernel,
        out_shape=jax.ShapeDtypeStruct((B, H, W, C), jnp.bfloat16),
        grid=(B, C // cb),
        in_specs=[
            pl.BlockSpec((1, H + 2, W + 2, cb), lambda bi, ci: (bi, 0, 0, ci)),
            pl.BlockSpec((9, cb), lambda bi, ci: (0, ci)),
            pl.BlockSpec((1, cb), lambda bi, ci: (0, ci)),
        ],
        out_specs=pl.BlockSpec((1, H, W, cb), lambda bi, ci: (bi, 0, 0, ci)),
        compiler_params=pltpu.CompilerParams(
            dimension_semantics=("parallel", "parallel")),
    )(xp, w.reshape(9, C).astype(jnp.float32), b.reshape(1, C).astype(jnp.float32))


# ----------------------------------------------------------------------------
# Fused: project 1x1 + residual add + final 1x1 conv + ReLU6 + global avg pool
# ----------------------------------------------------------------------------

def _proj_res_head_gap_kernel(d_ref, h_ref, pw_ref, pb_ref, hw_ref, hb_ref,
                              o_ref, acc_ref, *, inv_hw):
    t = pl.program_id(1)

    @pl.when(t == 0)
    def _():
        acc_ref[...] = jnp.zeros_like(acc_ref)

    d = d_ref[0]                                 # (tm, Ce) bf16
    h = h_ref[0]                                 # (tm, Cs) bf16
    p = jnp.dot(d, pw_ref[...], preferred_element_type=jnp.float32) + pb_ref[...]
    r = p + h.astype(jnp.float32)                # linear-bottleneck residual (f32)
    f = jnp.dot(r.astype(jnp.bfloat16), hw_ref[...],
                preferred_element_type=jnp.float32) + hb_ref[...]
    f = jnp.clip(f, 0.0, 6.0)
    acc_ref[...] += jnp.sum(f, axis=0, keepdims=True)

    @pl.when(t == pl.num_programs(1) - 1)
    def _():
        o_ref[...] = (acc_ref[...] * inv_hw)[None].astype(o_ref.dtype)


def proj_residual_headconv_gap(d, h, pw, pb, hw, hb, tm=128):
    """d:(B,HW,Ce) depthwise out, h:(B,HW,Cs) block input -> pooled (B,Cf) f32."""
    B, HW, Ce = d.shape
    Cs = h.shape[-1]
    Cf = hw.shape[-1]
    tm = min(tm, HW)
    while HW % tm:
        tm //= 2
    if tm % 8 and tm != HW:
        tm = HW
    T = HW // tm
    out = pl.pallas_call(
        functools.partial(_proj_res_head_gap_kernel, inv_hw=1.0 / HW),
        out_shape=jax.ShapeDtypeStruct((B, 1, Cf), jnp.float32),
        grid=(B, T),
        in_specs=[
            pl.BlockSpec((1, tm, Ce), lambda bi, t: (bi, t, 0)),
            pl.BlockSpec((1, tm, Cs), lambda bi, t: (bi, t, 0)),
            pl.BlockSpec((Ce, Cs), lambda bi, t: (0, 0)),
            pl.BlockSpec((1, Cs), lambda bi, t: (0, 0)),
            pl.BlockSpec((Cs, Cf), lambda bi, t: (0, 0)),
            pl.BlockSpec((1, Cf), lambda bi, t: (0, 0)),
        ],
        out_specs=pl.BlockSpec((1, 1, Cf), lambda bi, t: (bi, 0, 0)),
        scratch_shapes=[pltpu.VMEM((1, Cf), jnp.float32)],
        compiler_params=pltpu.CompilerParams(
            dimension_semantics=("parallel", "arbitrary")),
    )(d.astype(jnp.bfloat16), h.astype(jnp.bfloat16),
      pw.astype(jnp.bfloat16), pb.reshape(1, Cs).astype(jnp.float32),
      hw.astype(jnp.bfloat16), hb.reshape(1, Cf).astype(jnp.float32))
    return out.reshape(B, Cf)


# ----------------------------------------------------------------------------
# Fused fc + multi-task heads (heads concatenated along N -> lane-dense output)
# ----------------------------------------------------------------------------

def _fc_heads_kernel(x_ref, fw_ref, fb_ref, hw_ref, hb_ref, o_ref):
    base = jnp.dot(x_ref[...], fw_ref[...],
                   preferred_element_type=jnp.float32) + fb_ref[...]
    heads = jnp.dot(base.astype(jnp.bfloat16), hw_ref[...],
                    preferred_element_type=jnp.float32) + hb_ref[...]
    o_ref[...] = heads.astype(o_ref.dtype)


def fc_and_heads(pooled, fc_w, fc_b, heads_w, heads_b, num_heads, fdim):
    """pooled:(B,Cf) -> list of num_heads arrays (B, fdim) in one launch."""
    B, Cf = pooled.shape
    N = num_heads * fdim
    out = pl.pallas_call(
        _fc_heads_kernel,
        out_shape=jax.ShapeDtypeStruct((B, N), jnp.float32),
        grid=(1,),
        in_specs=[
            pl.BlockSpec((B, Cf), lambda i: (0, 0)),
            pl.BlockSpec((Cf, fdim), lambda i: (0, 0)),
            pl.BlockSpec((1, fdim), lambda i: (0, 0)),
            pl.BlockSpec((fdim, N), lambda i: (0, 0)),
            pl.BlockSpec((1, N), lambda i: (0, 0)),
        ],
        out_specs=pl.BlockSpec((B, N), lambda i: (0, 0)),
        compiler_params=pltpu.CompilerParams(dimension_semantics=("arbitrary",)),
    )(pooled.astype(jnp.bfloat16), fc_w.astype(jnp.bfloat16),
      fc_b.reshape(1, fdim).astype(jnp.float32),
      heads_w.astype(jnp.bfloat16), heads_b.reshape(1, N).astype(jnp.float32))
    return [out[:, i * fdim:(i + 1) * fdim] for i in range(num_heads)]


# ----------------------------------------------------------------------------
# Parameter init (deterministic, synthetic) — structure mirrors the module.
# ----------------------------------------------------------------------------

def init_params(key, *, cin=3, stem_c=128, exp_c=128, feat_c=128,
                feature_dim=128, num_heads=3):
    # NOTE: the PyTorch module declares each head as Linear(_feature_dim,
    # feature_dim) but applies it to the fc output (size feature_dim); the
    # forward is only consistent when feature_dim == _feature_dim, which is
    # the configuration used here.  Channel widths are multiples of 128 so
    # every kernel output is lane-dense.
    ks = list(jax.random.split(key, 13 + num_heads))

    def w(k, shape, scale=0.1):
        return (scale * jax.random.normal(k, shape)).astype(jnp.float32)

    heads_w = jnp.concatenate(
        [w(ks[12 + i], (feature_dim, feature_dim)) for i in range(num_heads)],
        axis=1)
    heads_b = jnp.concatenate(
        [w(jax.random.fold_in(ks[12 + i], 7), (feature_dim,), 0.01)
         for i in range(num_heads)], axis=0)

    return {
        "stem_w_s2d": stem_weight_s2d(w(ks[0], (3, 3, cin, stem_c))),
        "stem_b": w(ks[1], (stem_c,), 0.01),
        "exp_w": w(ks[2], (stem_c, exp_c)),
        "exp_b": w(ks[3], (exp_c,), 0.01),
        "dw_w": w(ks[4], (3, 3, exp_c)),
        "dw_b": w(ks[5], (exp_c,), 0.01),
        "proj_w": w(ks[6], (exp_c, stem_c)),
        "proj_b": w(ks[7], (stem_c,), 0.01),
        "head_conv_w": w(ks[8], (stem_c, feat_c)),
        "head_conv_b": w(ks[9], (feat_c,), 0.01),
        "fc_w": w(ks[10], (feat_c, feature_dim)),
        "fc_b": w(ks[11], (feature_dim,), 0.01),
        "heads_w": heads_w,
        "heads_b": heads_b,
        "num_heads": num_heads,
        "feature_dim": feature_dim,
    }


# ----------------------------------------------------------------------------
# Forward pass (mirrors MultiHeadMobileNet.forward)
# ----------------------------------------------------------------------------

def multihead_mobilenet_forward(x_nchw, params):
    """x_nchw: (B, 3, H, W) float32 (PyTorch layout). Returns a list of
    num_heads arrays, each (B, feature_dim)."""
    x = jnp.transpose(x_nchw, (0, 2, 3, 1)).astype(jnp.float32)   # NCHW -> NHWC
    B, H, W, _ = x.shape
    Ho, Wo = H // 2, W // 2

    # features: stem 3x3/s2 conv + ReLU6
    h = stem_conv_s2d(x, params["stem_w_s2d"], params["stem_b"])  # (B,Ho,Wo,Cs)
    Cs = h.shape[-1]

    # features: inverted-residual block — expand 1x1 + ReLU6 (M-tiled matmul)
    e = matmul_bias_act(h.reshape(B * Ho * Wo, Cs),
                        params["exp_w"], params["exp_b"], act="relu6")
    Ce = e.shape[-1]

    # depthwise 3x3 + ReLU6
    d = depthwise3x3_relu6(e.reshape(B, Ho, Wo, Ce),
                           params["dw_w"], params["dw_b"])

    # fused: project 1x1 + residual add + final 1x1 conv + ReLU6 + AvgPool(1,1)
    pooled = proj_residual_headconv_gap(
        d.reshape(B, Ho * Wo, Ce), h.reshape(B, Ho * Wo, Cs),
        params["proj_w"], params["proj_b"],
        params["head_conv_w"], params["head_conv_b"])             # (B, Cf) f32

    # fused: fc + multi-task heads
    return fc_and_heads(pooled, params["fc_w"], params["fc_b"],
                        params["heads_w"], params["heads_b"],
                        params["num_heads"], params["feature_dim"])


# ----------------------------------------------------------------------------

if __name__ == "__main__":
    key = jax.random.PRNGKey(0)
    pkey, xkey = jax.random.split(key)

    params = init_params(pkey)
    # Small NCHW 3-channel image input consistent with the module's interface.
    x = jax.random.normal(xkey, (2, 3, 32, 32), dtype=jnp.float32)

    outs = multihead_mobilenet_forward(x, params)
    outs = [jax.block_until_ready(o) for o in outs]

    assert len(outs) == 3
    for o in outs:
        assert o.shape == (2, 128)
        assert bool(jnp.all(jnp.isfinite(o)))

    print("KERNEL_OK")
</pallas_src>

<mosaic_0001>
module attributes {stable_mosaic.version = 11 : i64} {
  func.func @_stem_conv_kernel(%arg0: i32, %arg1: memref<1x290x12xbf16, #tpu.memory_space<vmem>>, %arg2: memref<4x12x128xbf16, #tpu.memory_space<vmem>>, %arg3: memref<1x128xf32, #tpu.memory_space<vmem>>, %arg4: memref<1x272x128xbf16, #tpu.memory_space<vmem>>) attributes {dimension_semantics = [#tpu.dimension_semantics<parallel>], iteration_bounds = array<i64: 2>, scalar_prefetch = 0 : i64, scratch_operands = 0 : i64, tpu.core_type = #tpu.core_type<tc>, window_params = [{transform_indices = @transform_0, window_bounds = array<i64: 1, 290, 12>}, {pipeline_mode = #tpu.pipeline_mode<synchronous>, transform_indices = @transform_1, window_bounds = array<i64: 4, 12, 128>}, {pipeline_mode = #tpu.pipeline_mode<synchronous>, transform_indices = @transform_2, window_bounds = array<i64: 1, 128>}, {transform_indices = @transform_3, window_bounds = array<i64: 1, 272, 128>}]} {
    %c0 = arith.constant 0 : index
    %c0_0 = arith.constant 0 : index
    %c0_1 = arith.constant 0 : index
    %0 = vector.load %arg1[%c0, %c0_0, %c0_1] : memref<1x290x12xbf16, #tpu.memory_space<vmem>>, vector<1x290x12xbf16>
    %1 = vector.shape_cast %0 : vector<1x290x12xbf16> to vector<290x12xbf16>
    %cst = arith.constant 0.000000e+00 : f32
    %2 = vector.broadcast %cst : f32 to vector<272x128xf32>
    %3 = vector.extract_strided_slice %1 {offsets = [0, 0], sizes = [272, 12], strides = [1, 1]} : vector<290x12xbf16> to vector<272x12xbf16>
    %c0_2 = arith.constant 0 : index
    %c0_3 = arith.constant 0 : index
    %c0_4 = arith.constant 0 : index
    %4 = vector.load %arg2[%c0_2, %c0_3, %c0_4] : memref<4x12x128xbf16, #tpu.memory_space<vmem>>, vector<1x12x128xbf16>
    %5 = vector.shape_cast %4 : vector<1x12x128xbf16> to vector<12x128xbf16>
    %cst_5 = arith.constant dense<0.000000e+00> : vector<272x128xf32>
    %6 = tpu.matmul %3, %5, %cst_5 {dimension_numbers = #tpu.dot_dimension_numbers<[1], [0], [0], [1], [0, 0, 1, 1], [], []>} : vector<272x12xbf16>, vector<12x128xbf16>, vector<272x128xf32> -> vector<272x128xf32>
    %7 = arith.addf %2, %6 : vector<272x128xf32>
    %8 = vector.extract_strided_slice %1 {offsets = [1, 0], sizes = [272, 12], strides = [1, 1]} : vector<290x12xbf16> to vector<272x12xbf16>
    %c1 = arith.constant 1 : index
    %c0_6 = arith.constant 0 : index
    %c0_7 = arith.constant 0 : index
    %9 = vector.load %arg2[%c1, %c0_6, %c0_7] : memref<4x12x128xbf16, #tpu.memory_space<vmem>>, vector<1x12x128xbf16>
    %10 = vector.shape_cast %9 : vector<1x12x128xbf16> to vector<12x128xbf16>
    %cst_8 = arith.constant dense<0.000000e+00> : vector<272x128xf32>
    %11 = tpu.matmul %8, %10, %cst_8 {dimension_numbers = #tpu.dot_dimension_numbers<[1], [0], [0], [1], [0, 0, 1, 1], [], []>} : vector<272x12xbf16>, vector<12x128xbf16>, vector<272x128xf32> -> vector<272x128xf32>
    %12 = arith.addf %7, %11 : vector<272x128xf32>
    %13 = vector.extract_strided_slice %1 {offsets = [17, 0], sizes = [272, 12], strides = [1, 1]} : vector<290x12xbf16> to vector<272x12xbf16>
    %c2 = arith.constant 2 : index
    %c0_9 = arith.constant 0 : index
    %c0_10 = arith.constant 0 : index
    %14 = vector.load %arg2[%c2, %c0_9, %c0_10] : memref<4x12x128xbf16, #tpu.memory_space<vmem>>, vector<1x12x128xbf16>
    %15 = vector.shape_cast %14 : vector<1x12x128xbf16> to vector<12x128xbf16>
    %cst_11 = arith.constant dense<0.000000e+00> : vector<272x128xf32>
    %16 = tpu.matmul %13, %15, %cst_11 {dimension_numbers = #tpu.dot_dimension_numbers<[1], [0], [0], [1], [0, 0, 1, 1], [], []>} : vector<272x12xbf16>, vector<12x128xbf16>, vector<272x128xf32> -> vector<272x128xf32>
    %17 = arith.addf %12, %16 : vector<272x128xf32>
    %18 = vector.extract_strided_slice %1 {offsets = [18, 0], sizes = [272, 12], strides = [1, 1]} : vector<290x12xbf16> to vector<272x12xbf16>
    %c3 = arith.constant 3 : index
    %c0_12 = arith.constant 0 : index
    %c0_13 = arith.constant 0 : index
    %19 = vector.load %arg2[%c3, %c0_12, %c0_13] : memref<4x12x128xbf16, #tpu.memory_space<vmem>>, vector<1x12x128xbf16>
    %20 = vector.shape_cast %19 : vector<1x12x128xbf16> to vector<12x128xbf16>
    %cst_14 = arith.constant dense<0.000000e+00> : vector<272x128xf32>
    %21 = tpu.matmul %18, %20, %cst_14 {dimension_numbers = #tpu.dot_dimension_numbers<[1], [0], [0], [1], [0, 0, 1, 1], [], []>} : vector<272x12xbf16>, vector<12x128xbf16>, vector<272x128xf32> -> vector<272x128xf32>
    %22 = arith.addf %17, %21 : vector<272x128xf32>
    %c0_15 = arith.constant 0 : index
    %c0_16 = arith.constant 0 : index
    %23 = vector.load %arg3[%c0_15, %c0_16] : memref<1x128xf32, #tpu.memory_space<vmem>>, vector<1x128xf32>
    %24 = vector.broadcast %23 : vector<1x128xf32> to vector<272x128xf32>
    %25 = arith.addf %22, %24 : vector<272x128xf32>
    %cst_17 = arith.constant 0.000000e+00 : f32
    %cst_18 = arith.constant 6.000000e+00 : f32
    %26 = vector.broadcast %cst_17 : f32 to vector<272x128xf32>
    %27 = arith.maximumf %26, %25 : vector<272x128xf32>
    %28 = vector.broadcast %cst_18 : f32 to vector<272x128xf32>
    %29 = arith.minimumf %28, %27 : vector<272x128xf32>
    %30 = vector.shape_cast %29 : vector<272x128xf32> to vector<1x272x128xf32>
    %31 = arith.truncf %30 : vector<1x272x128xf32> to vector<1x272x128xbf16>
    %c0_19 = arith.constant 0 : index
    %c0_20 = arith.constant 0 : index
    %c0_21 = arith.constant 0 : index
    %32 = vector.load %arg4[%c0_19, %c0_20, %c0_21] : memref<1x272x128xbf16, #tpu.memory_space<vmem>>, vector<1x272x128xbf16>
    tpu.vector_store %arg4[%c0_19, %c0_20, %c0_21], %31 {strides = array<i32>} : memref<1x272x128xbf16, #tpu.memory_space<vmem>>, vector<1x272x128xbf16>,
    return
  }
  func.func @transform_0(%arg0: i32) -> (i32, i32, i32) {
    %c0_i32 = arith.constant 0 : i32
    %c0_i32_0 = arith.constant 0 : i32
    %c0_i32_1 = arith.constant 0 : i32
    return %arg0, %c0_i32, %c0_i32_0 : i32, i32, i32
  }
  func.func @transform_1(%arg0: i32) -> (i32, i32, i32) {
    %c0_i32 = arith.constant 0 : i32
    %c0_i32_0 = arith.constant 0 : i32
    %c0_i32_1 = arith.constant 0 : i32
    %c0_i32_2 = arith.constant 0 : i32
    return %c0_i32, %c0_i32_0, %c0_i32_1 : i32, i32, i32
  }
  func.func @transform_2(%arg0: i32) -> (i32, i32) {
    %c0_i32 = arith.constant 0 : i32
    %c0_i32_0 = arith.constant 0 : i32
    %c0_i32_1 = arith.constant 0 : i32
    return %c0_i32, %c0_i32_0 : i32, i32
  }
  func.func @transform_3(%arg0: i32) -> (i32, i32, i32) {
    %c0_i32 = arith.constant 0 : i32
    %c0_i32_0 = arith.constant 0 : i32
    %c0_i32_1 = arith.constant 0 : i32
    return %arg0, %c0_i32, %c0_i32_0 : i32, i32, i32
  }
}

</mosaic_0001>

<llo_original>
// kernel: tpu_custom_call.1
$region0: #{tpu_custom_call.1}
  #allocation0 [shape = 'u32[]', space=smem, size = 0x4, offset = 0x4, fixed_abs, tag = 'smem constant byte address 0x4 - core index']
  #allocation1 [shape = 'u32[144,128]{1,0:T(1,128)}', space=vmem, size = 0x12000, scoped, tag = 'internal scratch']
  %s0 = inlined_call_operand.vmem [shape: bf16[2,290,12], index: 0, kind: input, shape index: {}]
  %s1 = inlined_call_operand.vmem [shape: bf16[4,12,128], index: 1, kind: input, shape index: {}]
  %s2 = inlined_call_operand.vmem [shape: f32[1,128], index: 2, kind: input, shape index: {}]
  %s3 = inlined_call_operand.hbm [shape: bf16[2,272,128], index: 3, kind: output, shape index: {}]
  %s4 = sld [smem:[#allocation0]]
  $region45: #{tpu_custom_call.1} parent=0
    _
  %s6 = ssub.s32 1, %s4
  %s7 = scalar_select 0, %s6, %s4
  $region1: #{tpu_custom_call.1} parent=0
    #allocation2 [shape = 'u8[139264]{0}', space=vmem, size = 0x22000, scoped, tag = 'output window, operand 0']
    #allocation3 [shape = 's32[2]{0}', space=sflag, size = 0x8, scoped, tag = 'scoped memory for tpu_custom_call.1']
    %8 = vsyncpa [#allocation3], 0
    %s9 = scalar_lea.sflag [#allocation3], 1
    %10 = vsyncpa %s9, 0
    loop: start=0, step=1, limit=4
    $region2: #{tpu_custom_call.1} parent=1 // loop_pre_header
      _
    $region3: #{tpu_custom_call.1} parent=1 // loop_header
      %s12 = sphi 0, %s16
      %p13 = scmp.ge.s32.totalorder %s12, 4
      %s22 = sphi 0, %s24
      %s25 = sphi 0, %s22
      %s26 = sphi 0, %s25
      %s42 = sphi 0, %s26
      %s46 = sphi 0, %s46
      %s48 = sphi 0, %s46
      %s49 = sphi 0, %s48
      %s63 = sphi 0, %s49
      %s67 = sphi 0, %s67
      %s69 = sphi 0, %s67
      %s70 = sphi 0, %s69
      %s84 = sphi 0, %s70
      %s90 = sphi 0, %s92
      %s93 = sphi 0, %s90
      %s94 = sphi 0, %s93
      %s110 = sphi 0, %s94
    $region4: #{tpu_custom_call.1} parent=1 // loop_header_branch
      %15 = sbr.rel (%p13) target = $region8
    $region5: #{tpu_custom_call.1} parent=1 // loop_body
      %s17 = ssub.s32 %s12, 1
      %s18 = ssub.s32 %s12, 2
      %s19 = sadd.s32 %s12, 1
      %s20 = ssub.s32 %s12, %s19
      %p21 = scmp.eq.s32.totalorder %s20, 0
      %s23 = sadd.s32 %s22, 1
      %s24 = scalar_select %p21, %s22, %s23
      %p27 = pneg %p21
      %p28 = scmp.eq.s32.totalorder %s12, 1
      %p29 = por %p27, %p28
      %p30 = scmp.ne.s32.totalorder %s22, %s25
      %p31 = scmp.eq.s32.totalorder %s12, 0
      %p32 = por %p30, %p31
      %p33 = scmp.ne.s32.totalorder %s22, %s25
      %p34 = scmp.eq.s32.totalorder %s17, 1
      %p35 = por %p33, %p34
      %p36 = scmp.ne.s32.totalorder %s25, %s26
      %p37 = scmp.eq.s32.totalorder %s17, 0
      %p38 = por %p36, %p37
      %p39 = scmp.ne.s32.totalorder %s25, %s26
      %p40 = scmp.eq.s32.totalorder %s18, 1
      %p41 = por %p39, %p40
      %p43 = scmp.ne.s32.totalorder %s26, %s42
      %p44 = scmp.eq.s32.totalorder %s18, 0
      %p45 = por %p43, %p44
      %s47 = sadd.s32 %s46, 1
      %p50 = scmp.eq.s32.totalorder %s12, 1
      %p51 = scmp.ne.s32.totalorder %s46, %s48
      %p52 = scmp.eq.s32.totalorder %s12, 0
      %p53 = por %p51, %p52
      %p54 = scmp.ne.s32.totalorder %s46, %s48
      %p55 = scmp.eq.s32.totalorder %s17, 1
      %p56 = por %p54, %p55
      %p57 = scmp.ne.s32.totalorder %s48, %s49
      %p58 = scmp.eq.s32.totalorder %s17, 0
      %p59 = por %p57, %p58
      %p60 = scmp.ne.s32.totalorder %s48, %s49
      %p61 = scmp.eq.s32.totalorder %s18, 1
      %p62 = por %p60, %p61
      %p64 = scmp.ne.s32.totalorder %s49, %s63
      %p65 = scmp.eq.s32.totalorder %s18, 0
      %p66 = por %p64, %p65
      %s68 = sadd.s32 %s67, 1
      %p71 = scmp.eq.s32.totalorder %s12, 1
      %p72 = scmp.ne.s32.totalorder %s67, %s69
      %p73 = scmp.eq.s32.totalorder %s12, 0
      %p74 = por %p72, %p73
      %p75 = scmp.ne.s32.totalorder %s67, %s69
      %p76 = scmp.eq.s32.totalorder %s17, 1
      %p77 = por %p75, %p76
      %p78 = scmp.ne.s32.totalorder %s69, %s70
      %p79 = scmp.eq.s32.totalorder %s17, 0
      %p80 = por %p78, %p79
      %p81 = scmp.ne.s32.totalorder %s69, %s70
      %p82 = scmp.eq.s32.totalorder %s18, 1
      %p83 = por %p81, %p82
      %p85 = scmp.ne.s32.totalorder %s70, %s84
      %p86 = scmp.eq.s32.totalorder %s18, 0
      %p87 = por %p85, %p86
      %s88 = ssub.s32 %s12, %s19
      %p89 = scmp.eq.s32.totalorder %s88, 0
      %s91 = sadd.s32 %s90, 1
      %s92 = scalar_select %p89, %s90, %s91
      %p95 = pneg %p89
      %p96 = scmp.eq.s32.totalorder %s12, 1
      %p97 = por %p95, %p96
      %p98 = scmp.ne.s32.totalorder %s90, %s93
      %p99 = scmp.eq.s32.totalorder %s12, 0
      %p100 = por %p98, %p99
      %p101 = scmp.ne.s32.totalorder %s90, %s93
      %p102 = scmp.eq.s32.totalorder %s17, 1
      %p103 = por %p101, %p102
      %p104 = scmp.ne.s32.totalorder %s93, %s94
      %p105 = scmp.eq.s32.totalorder %s17, 0
      %p106 = por %p104, %p105
      %p107 = scmp.ne.s32.totalorder %s93, %s94
      %p108 = scmp.eq.s32.totalorder %s18, 1
      %p109 = por %p107, %p108
      %p111 = scmp.ne.s32.totalorder %s94, %s110
      %p112 = scmp.eq.s32.totalorder %s18, 0
      %p113 = por %p111, %p112
      %p114 = scmp.le.s32.totalorder 1, %s12
      %p115 = scmp.lt.s32.totalorder %s12, 3
      %p116 = pnand %p114, %p115
      %p117 = pneg %p116
      // Predicated region
      $region9: #{tpu_custom_call.1} parent=5 // pred_check
        _
      $region10: #{tpu_custom_call.1} parent=5 // pred_check_branch
        %119 = sbr.rel (%p116) target = $region12
      $region11: #{tpu_custom_call.1} parent=5 // pred_region
        %s120 = ssub.s32 %s12, 1
        // Predicated region
        $region13: #{tpu_custom_call.1} parent=11 // pred_check
          %p121 = pneg %p59
        $region14: #{tpu_custom_call.1} parent=11 // pred_check_branch
          %123 = sbr.rel (%p121) target = $region16
        $region15: #{tpu_custom_call.1} parent=11 // pred_region
          _
        $region16: #{tpu_custom_call.1} parent=11 // pred_fallthru
          _
        // Predicated region
        $region17: #{tpu_custom_call.1} parent=11 // pred_check
          %p124 = pneg %p80
        $region18: #{tpu_custom_call.1} parent=11 // pred_check_branch
          %126 = sbr.rel (%p124) target = $region20
        $region19: #{tpu_custom_call.1} parent=11 // pred_region
          _
        $region20: #{tpu_custom_call.1} parent=11 // pred_fallthru
          _
      $region12: #{tpu_custom_call.1} parent=5 // pred_fallthru
        _
      %p127 = scmp.lt.s32.totalorder %s12, 2
      // Predicated region
      $region21: #{tpu_custom_call.1} parent=5 // pred_check
        %p128 = pneg %p127
      $region22: #{tpu_custom_call.1} parent=5 // pred_check_branch
        %130 = sbr.rel (%p128) target = $region24
      $region23: #{tpu_custom_call.1} parent=5 // pred_region
        // Predicated region
        $region25: #{tpu_custom_call.1} parent=23 // pred_check
          %p131 = pneg %p32
        $region26: #{tpu_custom_call.1} parent=23 // pred_check_branch
          %133 = sbr.rel (%p131) target = $region28
        $region27: #{tpu_custom_call.1} parent=23 // pred_region
          %p134 = scmp.lt.s32.totalorder %s12, 1
          %s135 = scalar_select %p134, %s12, 1
          %s136 = smul.addr %s135, 37
          %s137 = smul.addr %s136, 4
          %s138 = scalar_lea.vmem %s0, %s137
        $region28: #{tpu_custom_call.1} parent=23 // pred_fallthru
          _
      $region24: #{tpu_custom_call.1} parent=5 // pred_fallthru
        _
      %p139 = scmp.le.s32.totalorder 1, %s12
      %p140 = scmp.lt.s32.totalorder %s12, 3
      %p141 = pnand %p139, %p140
      %p142 = pneg %p141
      // Predicated region
      $region29: #{tpu_custom_call.1} parent=5 // pred_check
        _
      $region30: #{tpu_custom_call.1} parent=5 // pred_check_branch
        %144 = sbr.rel (%p141) target = $region32
      $region31: #{tpu_custom_call.1} parent=5 // pred_region
        %s145 = ssub.s32 %s12, 1
        %p146 = scmp.lt.s32.totalorder %s17, 1
        %s147 = scalar_select %p146, %s17, 1
        %s148 = smul.addr %s147, 37
        %s149 = smul.addr %s148, 4
        %s150 = scalar_lea.vmem %s0, %s149
        %p151 = pneg %p38
        %p152 = pneg %p35
        %p153 = pneg %p59
        %p154 = pneg %p56
        %p155 = pneg %p80
        %p156 = pneg %p77
        %p157 = pneg %p106
        %p158 = pneg %p103
        %s159 = sand.u32 %s93, 1
        %s160 = scalar_lea.sflag [#allocation3], %s159
        %s161 = sand.u32 %s93, 1
        %s162 = smul.addr %s161, 136
        %s163 = scalar_lea.vmem [#allocation2], %s162
        %p164 = scmp.lt.s32.totalorder %s17, 1
        %s165 = scalar_select %p164, %s17, 1
        %s166 = smul.addr %s165, 37
        %s167 = smul.addr %s166, 4
        %s168 = scalar_lea.vmem %s0, %s167
        %v170 = vld [vmem:[%s168] sm:$0xf]
        %v171 = vld [vmem:[%s168 + $0x4] sm:$0xf]
        %v172 = vld [vmem:[%s168 + $0x8] sm:$0xf]
        %v173 = vld [vmem:[%s168 + $0xc] sm:$0xf]
        %v174 = vld [vmem:[%s168 + $0x10] sm:$0xf]
        %v175 = vld [vmem:[%s168 + $0x14] sm:$0xf]
        %v176 = vld [vmem:[%s168 + $0x18] sm:$0xf]
        %v177 = vld [vmem:[%s168 + $0x1c] sm:$0xf]
        %v178 = vld [vmem:[%s168 + $0x20] sm:$0xf]
        %v179 = vld [vmem:[%s168 + $0x24] sm:$0xf]
        %v180 = vld [vmem:[%s168 + $0x28] sm:$0xf]
        %v181 = vld [vmem:[%s168 + $0x2c] sm:$0xf]
        %v182 = vld [vmem:[%s168 + $0x30] sm:$0xf]
        %v183 = vld [vmem:[%s168 + $0x34] sm:$0xf]
        %v184 = vld [vmem:[%s168 + $0x38] sm:$0xf]
        %v185 = vld [vmem:[%s168 + $0x3c] sm:$0xf]
        %v186 = vld [vmem:[%s168 + $0x40] sm:$0xf]
        %v187 = vld [vmem:[%s168 + $0x44] sm:$0xf]
        %v188 = vld [vmem:[%s168 + $0x48] sm:$0xf]
        %v189 = vld [vmem:[%s168 + $0x4c] sm:$0xf]
        %v190 = vld [vmem:[%s168 + $0x50] sm:$0xf]
        %v191 = vld [vmem:[%s168 + $0x54] sm:$0xf]
        %v192 = vld [vmem:[%s168 + $0x58] sm:$0xf]
        %v193 = vld [vmem:[%s168 + $0x5c] sm:$0xf]
        %v194 = vld [vmem:[%s168 + $0x60] sm:$0xf]
        %v195 = vld [vmem:[%s168 + $0x64] sm:$0xf]
        %v196 = vld [vmem:[%s168 + $0x68] sm:$0xf]
        %v197 = vld [vmem:[%s168 + $0x6c] sm:$0xf]
        %v198 = vld [vmem:[%s168 + $0x70] sm:$0xf]
        %v199 = vld [vmem:[%s168 + $0x74] sm:$0xf]
        %v200 = vld [vmem:[%s168 + $0x78] sm:$0xf]
        %v201 = vld [vmem:[%s168 + $0x7c] sm:$0xf]
        %v202 = vld [vmem:[%s168 + $0x80] sm:$0xf]
        %v203 = vld [vmem:[%s168 + $0x84] sm:$0xf]
        %v204 = vld [vmem:[%s168 + $0x88] sm:$0xf]
        %v205 = vld [vmem:[%s168 + $0x8c] sm:$0xf]
        %v206 = vld [vmem:[%s168 + $0x90] sm:$0x1]
        %v207 = vld [vmem:[%s1] sm:$0xf]
        %v208 = vld [vmem:[%s1 + $0x4] sm:$0x3]
        %s209 = scalar_lea.vmem %s1, 8
        %v210 = vld [vmem:[%s209] sm:$0xf]
        %v211 = vld [vmem:[%s209 + $0x4] sm:$0x3]
        %v247 = vunpack.c.l.b16 %v170
        %v248 = vunpack.c.l.b16 %v171
        %v249 = vunpack.c.l.b16 %v172
        %v250 = vunpack.c.l.b16 %v173
        %v251 = vunpack.c.l.b16 %v174
        %v252 = vunpack.c.l.b16 %v175
        %v253 = vunpack.c.l.b16 %v176
        %v254 = vunpack.c.l.b16 %v177
        %v255 = vunpack.c.l.b16 %v178
        %v256 = vunpack.c.l.b16 %v179
        %v257 = vunpack.c.l.b16 %v180
        %v258 = vunpack.c.l.b16 %v181
        %v259 = vunpack.c.l.b16 %v182
        %v260 = vunpack.c.l.b16 %v183
        %v261 = vunpack.c.l.b16 %v184
        %v262 = vunpack.c.l.b16 %v185
        %v263 = vunpack.c.l.b16 %v186
        %v264 = vunpack.c.l.b16 %v187
        %v265 = vunpack.c.l.b16 %v188
        %v266 = vunpack.c.l.b16 %v189
        %v267 = vunpack.c.l.b16 %v190
        %v268 = vunpack.c.l.b16 %v191
        %v269 = vunpack.c.l.b16 %v192
        %v270 = vunpack.c.l.b16 %v193
        %v271 = vunpack.c.l.b16 %v194
        %v272 = vunpack.c.l.b16 %v195
        %v273 = vunpack.c.l.b16 %v196
        %v274 = vunpack.c.l.b16 %v197
        %v275 = vunpack.c.l.b16 %v198
        %v276 = vunpack.c.l.b16 %v199
        %v277 = vunpack.c.l.b16 %v200
        %v278 = vunpack.c.l.b16 %v201
        %v279 = vunpack.c.l.b16 %v202
        %v280 = vunpack.c.l.b16 %v203
        %v281 = vunpack.c.l.b16 %v204
        %v282 = vpack.c.b16 %v248, %v247
        %v283 = vpack.c.b16 %v250, %v249
        %v284 = vpack.c.b16 %v252, %v251
        %v285 = vpack.c.b16 %v254, %v253
        %v286 = vpack.c.b16 %v256, %v255
        %v287 = vpack.c.b16 %v258, %v257
        %v288 = vpack.c.b16 %v260, %v259
        %v289 = vpack.c.b16 %v262, %v261
        %v290 = vpack.c.b16 %v264, %v263
        %v291 = vpack.c.b16 %v266, %v265
        %v292 = vpack.c.b16 %v268, %v267
        %v293 = vpack.c.b16 %v270, %v269
        %v294 = vpack.c.b16 %v272, %v271
        %v295 = vpack.c.b16 %v274, %v273
        %v296 = vpack.c.b16 %v276, %v275
        %v297 = vpack.c.b16 %v278, %v277
        %v298 = vpack.c.b16 %v280, %v279
        %v299 = vpack.c.b16 %v281, %v281
        %vm300 = vsmask.f32 7424
        %v302 = vshrl.u32 %v282, 16
        %v304 = vshll.u32 %v282, 16
        %v306 = vrot.slane %v304, 1
        %v307 = vor.u32 %v302, %v306
        %v309 = vshll.u32 %v283, 16
        %v311 = vrot.slane %v309, 1
        %v312 = vsel %vm300, %v307, %v311
        %v313 = vshrl.u32 %v283, 16
        %v315 = vor.u32 %v313, %v311
        %v317 = vshll.u32 %v284, 16
        %v319 = vrot.slane %v317, 1
        %v320 = vsel %vm300, %v315, %v319
        %v321 = vshrl.u32 %v284, 16
        %v323 = vor.u32 %v321, %v319
        %v325 = vshll.u32 %v285, 16
        %v327 = vrot.slane %v325, 1
        %v328 = vsel %vm300, %v323, %v327
        %v329 = vshrl.u32 %v285, 16
        %v331 = vor.u32 %v329, %v327
        %v333 = vshll.u32 %v286, 16
        %v335 = vrot.slane %v333, 1
        %v336 = vsel %vm300, %v331, %v335
        %v337 = vshrl.u32 %v286, 16
        %v339 = vor.u32 %v337, %v335
        %v341 = vshll.u32 %v287, 16
        %v343 = vrot.slane %v341, 1
        %v344 = vsel %vm300, %v339, %v343
        %v345 = vshrl.u32 %v287, 16
        %v347 = vor.u32 %v345, %v343
        %v349 = vshll.u32 %v288, 16
        %v351 = vrot.slane %v349, 1
        %v352 = vsel %vm300, %v347, %v351
        %v353 = vshrl.u32 %v288, 16
        %v355 = vor.u32 %v353, %v351
        %v357 = vshll.u32 %v289, 16
        %v359 = vrot.slane %v357, 1
        %v360 = vsel %vm300, %v355, %v359
        %v361 = vshrl.u32 %v289, 16
        %v363 = vor.u32 %v361, %v359
        %v365 = vshll.u32 %v290, 16
        %v367 = vrot.slane %v365, 1
        %v368 = vsel %vm300, %v363, %v367
        %v369 = vshrl.u32 %v290, 16
        %v371 = vor.u32 %v369, %v367
        %v373 = vshll.u32 %v291, 16
        %v375 = vrot.slane %v373, 1
        %v376 = vsel %vm300, %v371, %v375
        %v377 = vshrl.u32 %v291, 16
        %v379 = vor.u32 %v377, %v375
        %v381 = vshll.u32 %v292, 16
        %v383 = vrot.slane %v381, 1
        %v384 = vsel %vm300, %v379, %v383
        %v385 = vshrl.u32 %v292, 16
        %v387 = vor.u32 %v385, %v383
        %v389 = vshll.u32 %v293, 16
        %v391 = vrot.slane %v389, 1
        %v392 = vsel %vm300, %v387, %v391
        %v393 = vshrl.u32 %v293, 16
        %v395 = vor.u32 %v393, %v391
        %v397 = vshll.u32 %v294, 16
        %v399 = vrot.slane %v397, 1
        %v400 = vsel %vm300, %v395, %v399
        %v401 = vshrl.u32 %v294, 16
        %v403 = vor.u32 %v401, %v399
        %v405 = vshll.u32 %v295, 16
        %v407 = vrot.slane %v405, 1
        %v408 = vsel %vm300, %v403, %v407
        %v409 = vshrl.u32 %v295, 16
        %v411 = vor.u32 %v409, %v407
        %v413 = vshll.u32 %v296, 16
        %v415 = vrot.slane %v413, 1
        %v416 = vsel %vm300, %v411, %v415
        %v417 = vshrl.u32 %v296, 16
        %v419 = vor.u32 %v417, %v415
        %v421 = vshll.u32 %v297, 16
        %v423 = vrot.slane %v421, 1
        %v424 = vsel %vm300, %v419, %v423
        %v425 = vshrl.u32 %v297, 16
        %v427 = vor.u32 %v425, %v423
        %v429 = vshll.u32 %v298, 16
        %v431 = vrot.slane %v429, 1
        %v432 = vsel %vm300, %v427, %v431
        %v433 = vshrl.u32 %v298, 16
        %v435 = vor.u32 %v433, %v431
        %v437 = vshll.u32 %v299, 16
        %v439 = vrot.slane %v437, 1
        %v440 = vsel %vm300, %v435, %v439
        %v443 = vunpack.c.l.b16 %v210
        %v444 = vunpack.c.l.b16 %v211
        %v445 = vpack.c.b16 %v444, %v443
        %vm446 = vcmask 97280
        %v448 = vsel %vm446, %v312, 0
        %v451 = vsel %vm446, %v320, 0
        %v454 = vsel %vm446, %v328, 0
        %v457 = vsel %vm446, %v336, 0
        %v460 = vsel %vm446, %v344, 0
        %v463 = vsel %vm446, %v352, 0
        %v466 = vsel %vm446, %v360, 0
        %v469 = vsel %vm446, %v368, 0
        %v472 = vsel %vm446, %v376, 0
        %v475 = vsel %vm446, %v384, 0
        %v478 = vsel %vm446, %v392, 0
        %v481 = vsel %vm446, %v400, 0
        %v484 = vsel %vm446, %v408, 0
        %v487 = vsel %vm446, %v416, 0
        %v490 = vsel %vm446, %v424, 0
        %v493 = vsel %vm446, %v432, 0
        %v496 = vsel %vm446, %v440, 0
        %vm498 = vcmask 1045504
        %v500 = vsel %vm498, %v445, 0
        %502 = vmatprep.subr.bf16.mxu0 0
        %503 = vmatpush1.bf16.msra.mxu0 %v500
        %504 = vmatprep.subr.bf16.mxu0 0
        %505 = vmatpush1.bf16.msra.mxu0 0
        %506 = vmatprep.subr.bf16.mxu0 0
        %507 = vmatpush1.bf16.msra.mxu0 0
        %508 = vmatprep.subr.bf16.mxu0 0
        %509 = vmatpush1.bf16.msra.mxu0 0
        %510 = vmatprep.subr.bf16.mxu0 0
        %511 = vmatpush1.bf16.msra.mxu0 0
        %512 = vmatprep.subr.bf16.mxu0 0
        %513 = vmatpush1.bf16.msra.mxu0 0
        %514 = vmatprep.subr.bf16.mxu0 0
        %515 = vmatpush1.bf16.msra.mxu0 0
        %516 = vmatprep.subr.bf16.mxu0 0
        %517 = vmatpush1.bf16.msra.mxu0 0
        %518 = vmatprep.subr.bf16.mxu0 0
        %519 = vmatpush1.bf16.msra.mxu0 0
        %520 = vmatprep.subr.bf16.mxu0 0
        %521 = vmatpush1.bf16.msra.mxu0 0
        %522 = vmatprep.subr.bf16.mxu0 0
        %523 = vmatpush1.bf16.msra.mxu0 0
        %524 = vmatprep.subr.bf16.mxu0 0
        %525 = vmatpush1.bf16.msra.mxu0 0
        %526 = vmatprep.subr.bf16.mxu0 0
        %527 = vmatpush1.bf16.msra.mxu0 0
        %528 = vmatprep.subr.bf16.mxu0 0
        %529 = vmatpush1.bf16.msra.mxu0 0
        %530 = vmatprep.subr.bf16.mxu0 0
        %531 = vmatpush1.bf16.msra.mxu0 0
        %532 = vmatprep.subr.bf16.mxu0 0
        %533 = vmatpush1.bf16.msra.mxu0 0
        %534 = vmatprep.mubr.bf16.mxu0 0
        %535 = vmatmul.mubr.bf16.gmra.mrb[0].mxu0 %v448
        %v536 = vpop.f32.mrb[0].mxu0
        %v537 = vadd.f32 0.0, %v536
        %v538 = vpop.f32.mrb[0].mxu0
        %v539 = vpop.f32.mrb[0].mxu0
        %v540 = vadd.f32 0.0, %v539
        %v541 = vpop.f32.mrb[0].mxu0
        %542 = vmatprep.mubr.bf16.mxu0 0
        %543 = vmatmul.mubr.bf16.gmra.mrb[0].mxu0 %v451
        %v544 = vpop.f32.mrb[0].mxu0
        %v545 = vadd.f32 0.0, %v544
        %v546 = vpop.f32.mrb[0].mxu0
        %v547 = vpop.f32.mrb[0].mxu0
        %v548 = vadd.f32 0.0, %v547
        %v549 = vpop.f32.mrb[0].mxu0
        %550 = vmatprep.mubr.bf16.mxu0 0
        %551 = vmatmul.mubr.bf16.gmra.mrb[0].mxu0 %v454
        %v552 = vpop.f32.mrb[0].mxu0
        %v553 = vadd.f32 0.0, %v552
        %v554 = vpop.f32.mrb[0].mxu0
        %v555 = vpop.f32.mrb[0].mxu0
        %v556 = vadd.f32 0.0, %v555
        %v557 = vpop.f32.mrb[0].mxu0
        %558 = vmatprep.mubr.bf16.mxu0 0
        %559 = vmatmul.mubr.bf16.gmra.mrb[0].mxu0 %v457
        %v560 = vpop.f32.mrb[0].mxu0
        %v561 = vadd.f32 0.0, %v560
        %v562 = vpop.f32.mrb[0].mxu0
        %v563 = vpop.f32.mrb[0].mxu0
        %v564 = vadd.f32 0.0, %v563
        %v565 = vpop.f32.mrb[0].mxu0
        %566 = vmatprep.mubr.bf16.mxu0 0
        %567 = vmatmul.mubr.bf16.gmra.mrb[0].mxu0 %v460
        %v568 = vpop.f32.mrb[0].mxu0
        %v569 = vadd.f32 0.0, %v568
        %v570 = vpop.f32.mrb[0].mxu0
        %v571 = vpop.f32.mrb[0].mxu0
        %v572 = vadd.f32 0.0, %v571
        %v573 = vpop.f32.mrb[0].mxu0
        %574 = vmatprep.mubr.bf16.mxu0 0
        %575 = vmatmul.mubr.bf16.gmra.mrb[0].mxu0 %v463
        %v576 = vpop.f32.mrb[0].mxu0
        %v577 = vadd.f32 0.0, %v576
        %v578 = vpop.f32.mrb[0].mxu0
        %v579 = vpop.f32.mrb[0].mxu0
        %v580 = vadd.f32 0.0, %v579
        %v581 = vpop.f32.mrb[0].mxu0
        %582 = vmatprep.mubr.bf16.mxu0 0
        %583 = vmatmul.mubr.bf16.gmra.mrb[0].mxu0 %v466
        %v584 = vpop.f32.mrb[0].mxu0
        %v585 = vadd.f32 0.0, %v584
        %v586 = vpop.f32.mrb[0].mxu0
        %v587 = vpop.f32.mrb[0].mxu0
        %v588 = vadd.f32 0.0, %v587
        %v589 = vpop.f32.mrb[0].mxu0
        %590 = vmatprep.mubr.bf16.mxu0 0
        %591 = vmatmul.mubr.bf16.gmra.mrb[0].mxu0 %v469
        %v592 = vpop.f32.mrb[0].mxu0
        %v593 = vadd.f32 0.0, %v592
        %v594 = vpop.f32.mrb[0].mxu0
        %v595 = vpop.f32.mrb[0].mxu0
        %v596 = vadd.f32 0.0, %v595
        %v597 = vpop.f32.mrb[0].mxu0
        %598 = vmatprep.mubr.bf16.mxu0 0
        %599 = vmatmul.mubr.bf16.gmra.mrb[0].mxu0 %v472
        %v600 = vpop.f32.mrb[0].mxu0
        %v601 = vadd.f32 0.0, %v600
        %v602 = vpop.f32.mrb[0].mxu0
        %v603 = vpop.f32.mrb[0].mxu0
        %v604 = vadd.f32 0.0, %v603
        %v605 = vpop.f32.mrb[0].mxu0
        %606 = vmatprep.mubr.bf16.mxu0 0
        %607 = vmatmul.mubr.bf16.gmra.mrb[0].mxu0 %v475
        %v608 = vpop.f32.mrb[0].mxu0
        %v609 = vadd.f32 0.0, %v608
        %v610 = vpop.f32.mrb[0].mxu0
        %v611 = vpop.f32.mrb[0].mxu0
        %v612 = vadd.f32 0.0, %v611
        %v613 = vpop.f32.mrb[0].mxu0
        %614 = vmatprep.mubr.bf16.mxu0 0
        %615 = vmatmul.mubr.bf16.gmra.mrb[0].mxu0 %v478
        %v616 = vpop.f32.mrb[0].mxu0
        %v617 = vadd.f32 0.0, %v616
        %v618 = vpop.f32.mrb[0].mxu0
        %v619 = vpop.f32.mrb[0].mxu0
        %v620 = vadd.f32 0.0, %v619
        %v621 = vpop.f32.mrb[0].mxu0
        %622 = vmatprep.mubr.bf16.mxu0 0
        %623 = vmatmul.mubr.bf16.gmra.mrb[0].mxu0 %v481
        %v624 = vpop.f32.mrb[0].mxu0
        %v625 = vadd.f32 0.0, %v624
        %v626 = vpop.f32.mrb[0].mxu0
        %v627 = vpop.f32.mrb[0].mxu0
        %v628 = vadd.f32 0.0, %v627
        %v629 = vpop.f32.mrb[0].mxu0
        %630 = vmatprep.mubr.bf16.mxu0 0
        %631 = vmatmul.mubr.bf16.gmra.mrb[0].mxu0 %v484
        %v632 = vpop.f32.mrb[0].mxu0
        %v633 = vadd.f32 0.0, %v632
        %v634 = vpop.f32.mrb[0].mxu0
        %v635 = vpop.f32.mrb[0].mxu0
        %v636 = vadd.f32 0.0, %v635
        %v637 = vpop.f32.mrb[0].mxu0
        %638 = vmatprep.mubr.bf16.mxu0 0
        %639 = vmatmul.mubr.bf16.gmra.mrb[0].mxu0 %v487
        %v640 = vpop.f32.mrb[0].mxu0
        %v641 = vadd.f32 0.0, %v640
        %v642 = vpop.f32.mrb[0].mxu0
        %v643 = vpop.f32.mrb[0].mxu0
        %v644 = vadd.f32 0.0, %v643
        %v645 = vpop.f32.mrb[0].mxu0
        %646 = vmatprep.mubr.bf16.mxu0 0
        %647 = vmatmul.mubr.bf16.gmra.mrb[0].mxu0 %v490
        %v648 = vpop.f32.mrb[0].mxu0
        %v649 = vadd.f32 0.0, %v648
        %v650 = vpop.f32.mrb[0].mxu0
        %v651 = vpop.f32.mrb[0].mxu0
        %v652 = vadd.f32 0.0, %v651
        %v653 = vpop.f32.mrb[0].mxu0
        %654 = vmatprep.mubr.bf16.mxu0 0
        %655 = vmatmul.mubr.bf16.gmra.mrb[0].mxu0 %v493
        %v656 = vpop.f32.mrb[0].mxu0
        %v657 = vadd.f32 0.0, %v656
        %v658 = vpop.f32.mrb[0].mxu0
        %v659 = vpop.f32.mrb[0].mxu0
        %v660 = vadd.f32 0.0, %v659
        %v661 = vpop.f32.mrb[0].mxu0
        %662 = vmatprep.mubr.bf16.mxu0 0
        %663 = vmatmul.mubr.bf16.gmra.mrb[0].mxu0 %v496
        %v664 = vpop.f32.mrb[0].mxu0
        %v665 = vadd.f32 0.0, %v664
        %v666 = vpop.f32.mrb[0].mxu0
        %v667 = vpop.f32.mrb[0].mxu0
        %v668 = vadd.f32 0.0, %v667
        %v669 = vpop.f32.mrb[0].mxu0
        %670 = vdwg.mxu0
        %v673 = vunpack.c.l.b16 %v207
        %v674 = vunpack.c.l.b16 %v208
        %v675 = vpack.c.b16 %v674, %v673
        %v676 = vsel %vm446, %v282, 0
        %v678 = vsel %vm446, %v283, 0
        %v680 = vsel %vm446, %v284, 0
        %v682 = vsel %vm446, %v285, 0
        %v684 = vsel %vm446, %v286, 0
        %v686 = vsel %vm446, %v287, 0
        %v688 = vsel %vm446, %v288, 0
        %v690 = vsel %vm446, %v289, 0
        %v692 = vsel %vm446, %v290, 0
        %v694 = vsel %vm446, %v291, 0
        %v696 = vsel %vm446, %v292, 0
        %v698 = vsel %vm446, %v293, 0
        %v700 = vsel %vm446, %v294, 0
        %v702 = vsel %vm446, %v295, 0
        %v704 = vsel %vm446, %v296, 0
        %v706 = vsel %vm446, %v297, 0
        %v708 = vsel %vm446, %v298, 0
        %v711 = vsel %vm498, %v675, 0
        %713 = vmatprep.subr.bf16.mxu0 0
        %714 = vmatpush1.bf16.msra.mxu0 %v711
        %715 = vmatprep.subr.bf16.mxu0 0
        %716 = vmatpush1.bf16.msra.mxu0 0
        %717 = vmatprep.subr.bf16.mxu0 0
        %718 = vmatpush1.bf16.msra.mxu0 0
        %719 = vmatprep.subr.bf16.mxu0 0
        %720 = vmatpush1.bf16.msra.mxu0 0
        %721 = vmatprep.subr.bf16.mxu0 0
        %722 = vmatpush1.bf16.msra.mxu0 0
        %723 = vmatprep.subr.bf16.mxu0 0
        %724 = vmatpush1.bf16.msra.mxu0 0
        %725 = vmatprep.subr.bf16.mxu0 0
        %726 = vmatpush1.bf16.msra.mxu0 0
        %727 = vmatprep.subr.bf16.mxu0 0
        %728 = vmatpush1.bf16.msra.mxu0 0
        %729 = vmatprep.subr.bf16.mxu0 0
        %730 = vmatpush1.bf16.msra.mxu0 0
        %731 = vmatprep.subr.bf16.mxu0 0
        %732 = vmatpush1.bf16.msra.mxu0 0
        %733 = vmatprep.subr.bf16.mxu0 0
        %734 = vmatpush1.bf16.msra.mxu0 0
        %735 = vmatprep.subr.bf16.mxu0 0
        %736 = vmatpush1.bf16.msra.mxu0 0
        %737 = vmatprep.subr.bf16.mxu0 0
        %738 = vmatpush1.bf16.msra.mxu0 0
        %739 = vmatprep.subr.bf16.mxu0 0
        %740 = vmatpush1.bf16.msra.mxu0 0
        %741 = vmatprep.subr.bf16.mxu0 0
        %742 = vmatpush1.bf16.msra.mxu0 0
        %743 = vmatprep.subr.bf16.mxu0 0
        %744 = vmatpush1.bf16.msra.mxu0 0
        %745 = vmatprep.mubr.bf16.mxu0 0
        %746 = vmatmul.mubr.bf16.gmra.mrb[0].mxu0 %v676
        %v747 = vpop.f32.mrb[0].mxu0
        %v748 = vadd.f32 %v537, %v747
        %v749 = vpop.f32.mrb[0].mxu0
        %v750 = vpop.f32.mrb[0].mxu0
        %v751 = vadd.f32 %v540, %v750
        %v752 = vpop.f32.mrb[0].mxu0
        %753 = vmatprep.mubr.bf16.mxu0 0
        %754 = vmatmul.mubr.bf16.gmra.mrb[0].mxu0 %v678
        %v755 = vpop.f32.mrb[0].mxu0
        %v756 = vadd.f32 %v545, %v755
        %v757 = vpop.f32.mrb[0].mxu0
        %v758 = vpop.f32.mrb[0].mxu0
        %v759 = vadd.f32 %v548, %v758
        %v760 = vpop.f32.mrb[0].mxu0
        %761 = vmatprep.mubr.bf16.mxu0 0
        %762 = vmatmul.mubr.bf16.gmra.mrb[0].mxu0 %v680
        %v763 = vpop.f32.mrb[0].mxu0
        %v764 = vadd.f32 %v553, %v763
        %v765 = vpop.f32.mrb[0].mxu0
        %v766 = vpop.f32.mrb[0].mxu0
        %v767 = vadd.f32 %v556, %v766
        %v768 = vpop.f32.mrb[0].mxu0
        %769 = vmatprep.mubr.bf16.mxu0 0
        %770 = vmatmul.mubr.bf16.gmra.mrb[0].mxu0 %v682
        %v771 = vpop.f32.mrb[0].mxu0
        %v772 = vadd.f32 %v561, %v771
        %v773 = vpop.f32.mrb[0].mxu0
        %v774 = vpop.f32.mrb[0].mxu0
        %v775 = vadd.f32 %v564, %v774
        %v776 = vpop.f32.mrb[0].mxu0
        %777 = vmatprep.mubr.bf16.mxu0 0
        %778 = vmatmul.mubr.bf16.gmra.mrb[0].mxu0 %v684
        %v779 = vpop.f32.mrb[0].mxu0
        %v780 = vadd.f32 %v569, %v779
        %v781 = vpop.f32.mrb[0].mxu0
        %v782 = vpop.f32.mrb[0].mxu0
        %v783 = vadd.f32 %v572, %v782
        %v784 = vpop.f32.mrb[0].mxu0
        %785 = vmatprep.mubr.bf16.mxu0 0
        %786 = vmatmul.mubr.bf16.gmra.mrb[0].mxu0 %v686
        %v787 = vpop.f32.mrb[0].mxu0
        %v788 = vadd.f32 %v577, %v787
        %v789 = vpop.f32.mrb[0].mxu0
        %v790 = vpop.f32.mrb[0].mxu0
        %v791 = vadd.f32 %v580, %v790
        %v792 = vpop.f32.mrb[0].mxu0
        %793 = vmatprep.mubr.bf16.mxu0 0
        %794 = vmatmul.mubr.bf16.gmra.mrb[0].mxu0 %v688
        %v795 = vpop.f32.mrb[0].mxu0
        %v796 = vadd.f32 %v585, %v795
        %v797 = vpop.f32.mrb[0].mxu0
        %v798 = vpop.f32.mrb[0].mxu0
        %v799 = vadd.f32 %v588, %v798
        %v800 = vpop.f32.mrb[0].mxu0
        %801 = vmatprep.mubr.bf16.mxu0 0
        %802 = vmatmul.mubr.bf16.gmra.mrb[0].mxu0 %v690
        %v803 = vpop.f32.mrb[0].mxu0
        %v804 = vadd.f32 %v593, %v803
        %v805 = vpop.f32.mrb[0].mxu0
        %v806 = vpop.f32.mrb[0].mxu0
        %v807 = vadd.f32 %v596, %v806
        %v808 = vpop.f32.mrb[0].mxu0
        %809 = vmatprep.mubr.bf16.mxu0 0
        %810 = vmatmul.mubr.bf16.gmra.mrb[0].mxu0 %v692
        %v811 = vpop.f32.mrb[0].mxu0
        %v812 = vadd.f32 %v601, %v811
        %v813 = vpop.f32.mrb[0].mxu0
        %v814 = vpop.f32.mrb[0].mxu0
        %v815 = vadd.f32 %v604, %v814
        %v816 = vpop.f32.mrb[0].mxu0
        %817 = vmatprep.mubr.bf16.mxu0 0
        %818 = vmatmul.mubr.bf16.gmra.mrb[0].mxu0 %v694
        %v819 = vpop.f32.mrb[0].mxu0
        %v820 = vadd.f32 %v609, %v819
        %v821 = vpop.f32.mrb[0].mxu0
        %v822 = vpop.f32.mrb[0].mxu0
        %v823 = vadd.f32 %v612, %v822
        %v824 = vpop.f32.mrb[0].mxu0
        %825 = vmatprep.mubr.bf16.mxu0 0
        %826 = vmatmul.mubr.bf16.gmra.mrb[0].mxu0 %v696
        %v827 = vpop.f32.mrb[0].mxu0
        %v828 = vadd.f32 %v617, %v827
        %v829 = vpop.f32.mrb[0].mxu0
        %v830 = vpop.f32.mrb[0].mxu0
        %v831 = vadd.f32 %v620, %v830
        %v832 = vpop.f32.mrb[0].mxu0
        %833 = vmatprep.mubr.bf16.mxu0 0
        %834 = vmatmul.mubr.bf16.gmra.mrb[0].mxu0 %v698
        %v835 = vpop.f32.mrb[0].mxu0
        %v836 = vadd.f32 %v625, %v835
        %v837 = vpop.f32.mrb[0].mxu0
        %v838 = vpop.f32.mrb[0].mxu0
        %v839 = vadd.f32 %v628, %v838
        %v840 = vpop.f32.mrb[0].mxu0
        %841 = vmatprep.mubr.bf16.mxu0 0
        %842 = vmatmul.mubr.bf16.gmra.mrb[0].mxu0 %v700
        %v843 = vpop.f32.mrb[0].mxu0
        %v844 = vadd.f32 %v633, %v843
        %v845 = vpop.f32.mrb[0].mxu0
        %v846 = vpop.f32.mrb[0].mxu0
        %v847 = vadd.f32 %v636, %v846
        %v848 = vpop.f32.mrb[0].mxu0
        %849 = vmatprep.mubr.bf16.mxu0 0
        %850 = vmatmul.mubr.bf16.gmra.mrb[0].mxu0 %v702
        %v851 = vpop.f32.mrb[0].mxu0
        %v852 = vadd.f32 %v641, %v851
        %v853 = vpop.f32.mrb[0].mxu0
        %v854 = vpop.f32.mrb[0].mxu0
        %v855 = vadd.f32 %v644, %v854
        %v856 = vpop.f32.mrb[0].mxu0
        %857 = vmatprep.mubr.bf16.mxu0 0
        %858 = vmatmul.mubr.bf16.gmra.mrb[0].mxu0 %v704
        %v859 = vpop.f32.mrb[0].mxu0
        %v860 = vadd.f32 %v649, %v859
        %v861 = vpop.f32.mrb[0].mxu0
        %v862 = vpop.f32.mrb[0].mxu0
        %v863 = vadd.f32 %v652, %v862
        %v864 = vpop.f32.mrb[0].mxu0
        %865 = vmatprep.mubr.bf16.mxu0 0
        %866 = vmatmul.mubr.bf16.gmra.mrb[0].mxu0 %v706
        %v867 = vpop.f32.mrb[0].mxu0
        %v868 = vadd.f32 %v657, %v867
        %v869 = vpop.f32.mrb[0].mxu0
        %v870 = vpop.f32.mrb[0].mxu0
        %v871 = vadd.f32 %v660, %v870
        %v872 = vpop.f32.mrb[0].mxu0
        %873 = vmatprep.mubr.bf16.mxu0 0
        %874 = vmatmul.mubr.bf16.gmra.mrb[0].mxu0 %v708
        %v875 = vpop.f32.mrb[0].mxu0
        %v876 = vadd.f32 %v665, %v875
        %v877 = vpop.f32.mrb[0].mxu0
        %v878 = vpop.f32.mrb[0].mxu0
        %v879 = vadd.f32 %v668, %v878
        %v880 = vpop.f32.mrb[0].mxu0
        %881 = vdwg.mxu0
        %s882 = scalar_lea.vmem %s1, 16
        %v883 = vld [vmem:[%s882] sm:$0xf]
        %v884 = vld [vmem:[%s882 + $0x4] sm:$0x3]
        %v887 = vunpack.c.l.b16 %v205
        %v888 = vunpack.c.l.b16 %v206
        %v889 = vpack.c.b16 %v887, %v281
        %v890 = vpack.c.b16 %v888, %v888
        %v892 = vshll.u32 %v889, 16
        %v894 = vrot.slane %v892, 1
        %v895 = vsel %vm300, %v435, %v894
        %v896 = vshrl.u32 %v889, 16
        %v898 = vor.u32 %v896, %v894
        %v900 = vshll.u32 %v890, 16
        %v902 = vrot.slane %v900, 1
        %v903 = vsel %vm300, %v898, %v902
        %v906 = vunpack.c.l.b16 %v883
        %v907 = vunpack.c.l.b16 %v884
        %v908 = vpack.c.b16 %v907, %v906
        %v910 = vsel %vm446, %v895, 0
        %v913 = vsel %vm446, %v903, 0
        %v916 = vsel %vm498, %v908, 0
        %918 = vmatprep.subr.bf16.mxu0 0
        %919 = vmatpush1.bf16.msra.mxu0 %v916
        %920 = vmatprep.subr.bf16.mxu0 0
        %921 = vmatpush1.bf16.msra.mxu0 0
        %922 = vmatprep.subr.bf16.mxu0 0
        %923 = vmatpush1.bf16.msra.mxu0 0
        %924 = vmatprep.subr.bf16.mxu0 0
        %925 = vmatpush1.bf16.msra.mxu0 0
        %926 = vmatprep.subr.bf16.mxu0 0
        %927 = vmatpush1.bf16.msra.mxu0 0
        %928 = vmatprep.subr.bf16.mxu0 0
        %929 = vmatpush1.bf16.msra.mxu0 0
        %930 = vmatprep.subr.bf16.mxu0 0
        %931 = vmatpush1.bf16.msra.mxu0 0
        %932 = vmatprep.subr.bf16.mxu0 0
        %933 = vmatpush1.bf16.msra.mxu0 0
        %934 = vmatprep.subr.bf16.mxu0 0
        %935 = vmatpush1.bf16.msra.mxu0 0
        %936 = vmatprep.subr.bf16.mxu0 0
        %937 = vmatpush1.bf16.msra.mxu0 0
        %938 = vmatprep.subr.bf16.mxu0 0
        %939 = vmatpush1.bf16.msra.mxu0 0
        %940 = vmatprep.subr.bf16.mxu0 0
        %941 = vmatpush1.bf16.msra.mxu0 0
        %942 = vmatprep.subr.bf16.mxu0 0
        %943 = vmatpush1.bf16.msra.mxu0 0
        %944 = vmatprep.subr.bf16.mxu0 0
        %945 = vmatpush1.bf16.msra.mxu0 0
        %946 = vmatprep.subr.bf16.mxu0 0
        %947 = vmatpush1.bf16.msra.mxu0 0
        %948 = vmatprep.subr.bf16.mxu0 0
        %949 = vmatpush1.bf16.msra.mxu0 0
        %950 = vmatprep.mubr.bf16.mxu0 0
        %951 = vmatmul.mubr.bf16.gmra.mrb[0].mxu0 %v451
        %v952 = vpop.f32.mrb[0].mxu0
        %v953 = vadd.f32 0.0, %v952
        %v954 = vpop.f32.mrb[0].mxu0
        %v955 = vpop.f32.mrb[0].mxu0
        %v956 = vadd.f32 0.0, %v955
        %v957 = vpop.f32.mrb[0].mxu0
        %958 = vmatprep.mubr.bf16.mxu0 0
        %959 = vmatmul.mubr.bf16.gmra.mrb[0].mxu0 %v454
        %v960 = vpop.f32.mrb[0].mxu0
        %v961 = vadd.f32 0.0, %v960
        %v962 = vpop.f32.mrb[0].mxu0
        %v963 = vpop.f32.mrb[0].mxu0
        %v964 = vadd.f32 0.0, %v963
        %v965 = vpop.f32.mrb[0].mxu0
        %966 = vmatprep.mubr.bf16.mxu0 0
        %967 = vmatmul.mubr.bf16.gmra.mrb[0].mxu0 %v457
        %v968 = vpop.f32.mrb[0].mxu0
        %v969 = vadd.f32 0.0, %v968
        %v970 = vpop.f32.mrb[0].mxu0
        %v971 = vpop.f32.mrb[0].mxu0
        %v972 = vadd.f32 0.0, %v971
        %v973 = vpop.f32.mrb[0].mxu0
        %974 = vmatprep.mubr.bf16.mxu0 0
        %975 = vmatmul.mubr.bf16.gmra.mrb[0].mxu0 %v460
        %v976 = vpop.f32.mrb[0].mxu0
        %v977 = vadd.f32 0.0, %v976
        %v978 = vpop.f32.mrb[0].mxu0
        %v979 = vpop.f32.mrb[0].mxu0
        %v980 = vadd.f32 0.0, %v979
        %v981 = vpop.f32.mrb[0].mxu0
        %982 = vmatprep.mubr.bf16.mxu0 0
        %983 = vmatmul.mubr.bf16.gmra.mrb[0].mxu0 %v463
        %v984 = vpop.f32.mrb[0].mxu0
        %v985 = vadd.f32 0.0, %v984
        %v986 = vpop.f32.mrb[0].mxu0
        %v987 = vpop.f32.mrb[0].mxu0
        %v988 = vadd.f32 0.0, %v987
        %v989 = vpop.f32.mrb[0].mxu0
        %990 = vmatprep.mubr.bf16.mxu0 0
        %991 = vmatmul.mubr.bf16.gmra.mrb[0].mxu0 %v466
        %v992 = vpop.f32.mrb[0].mxu0
        %v993 = vadd.f32 0.0, %v992
        %v994 = vpop.f32.mrb[0].mxu0
        %v995 = vpop.f32.mrb[0].mxu0
        %v996 = vadd.f32 0.0, %v995
        %v997 = vpop.f32.mrb[0].mxu0
        %998 = vmatprep.mubr.bf16.mxu0 0
        %999 = vmatmul.mubr.bf16.gmra.mrb[0].mxu0 %v469
        %v1000 = vpop.f32.mrb[0].mxu0
        %v1001 = vadd.f32 0.0, %v1000
        %v1002 = vpop.f32.mrb[0].mxu0
        %v1003 = vpop.f32.mrb[0].mxu0
        %v1004 = vadd.f32 0.0, %v1003
        %v1005 = vpop.f32.mrb[0].mxu0
        %1006 = vmatprep.mubr.bf16.mxu0 0
        %1007 = vmatmul.mubr.bf16.gmra.mrb[0].mxu0 %v472
        %v1008 = vpop.f32.mrb[0].mxu0
        %v1009 = vadd.f32 0.0, %v1008
        %v1010 = vpop.f32.mrb[0].mxu0
        %v1011 = vpop.f32.mrb[0].mxu0
        %v1012 = vadd.f32 0.0, %v1011
        %v1013 = vpop.f32.mrb[0].mxu0
        %1014 = vmatprep.mubr.bf16.mxu0 0
        %1015 = vmatmul.mubr.bf16.gmra.mrb[0].mxu0 %v475
        %v1016 = vpop.f32.mrb[0].mxu0
        %v1017 = vadd.f32 0.0, %v1016
        %v1018 = vpop.f32.mrb[0].mxu0
        %v1019 = vpop.f32.mrb[0].mxu0
        %v1020 = vadd.f32 0.0, %v1019
        %v1021 = vpop.f32.mrb[0].mxu0
        %1022 = vmatprep.mubr.bf16.mxu0 0
        %1023 = vmatmul.mubr.bf16.gmra.mrb[0].mxu0 %v478
        %v1024 = vpop.f32.mrb[0].mxu0
        %v1025 = vadd.f32 0.0, %v1024
        %v1026 = vpop.f32.mrb[0].mxu0
        %v1027 = vpop.f32.mrb[0].mxu0
        %v1028 = vadd.f32 0.0, %v1027
        %v1029 = vpop.f32.mrb[0].mxu0
        %1030 = vmatprep.mubr.bf16.mxu0 0
        %1031 = vmatmul.mubr.bf16.gmra.mrb[0].mxu0 %v481
        %v1032 = vpop.f32.mrb[0].mxu0
        %v1033 = vadd.f32 0.0, %v1032
        %v1034 = vpop.f32.mrb[0].mxu0
        %v1035 = vpop.f32.mrb[0].mxu0
        %v1036 = vadd.f32 0.0, %v1035
        %v1037 = vpop.f32.mrb[0].mxu0
        %1038 = vmatprep.mubr.bf16.mxu0 0
        %1039 = vmatmul.mubr.bf16.gmra.mrb[0].mxu0 %v484
        %v1040 = vpop.f32.mrb[0].mxu0
        %v1041 = vadd.f32 0.0, %v1040
        %v1042 = vpop.f32.mrb[0].mxu0
        %v1043 = vpop.f32.mrb[0].mxu0
        %v1044 = vadd.f32 0.0, %v1043
        %v1045 = vpop.f32.mrb[0].mxu0
        %1046 = vmatprep.mubr.bf16.mxu0 0
        %1047 = vmatmul.mubr.bf16.gmra.mrb[0].mxu0 %v487
        %v1048 = vpop.f32.mrb[0].mxu0
        %v1049 = vadd.f32 0.0, %v1048
        %v1050 = vpop.f32.mrb[0].mxu0
        %v1051 = vpop.f32.mrb[0].mxu0
        %v1052 = vadd.f32 0.0, %v1051
        %v1053 = vpop.f32.mrb[0].mxu0
        %1054 = vmatprep.mubr.bf16.mxu0 0
        %1055 = vmatmul.mubr.bf16.gmra.mrb[0].mxu0 %v490
        %v1056 = vpop.f32.mrb[0].mxu0
        %v1057 = vadd.f32 0.0, %v1056
        %v1058 = vpop.f32.mrb[0].mxu0
        %v1059 = vpop.f32.mrb[0].mxu0
        %v1060 = vadd.f32 0.0, %v1059
        %v1061 = vpop.f32.mrb[0].mxu0
        %1062 = vmatprep.mubr.bf16.mxu0 0
        %1063 = vmatmul.mubr.bf16.gmra.mrb[0].mxu0 %v493
        %v1064 = vpop.f32.mrb[0].mxu0
        %v1065 = vadd.f32 0.0, %v1064
        %v1066 = vpop.f32.mrb[0].mxu0
        %v1067 = vpop.f32.mrb[0].mxu0
        %v1068 = vadd.f32 0.0, %v1067
        %v1069 = vpop.f32.mrb[0].mxu0
        %1070 = vmatprep.mubr.bf16.mxu0 0
        %1071 = vmatmul.mubr.bf16.gmra.mrb[0].mxu0 %v910
        %v1072 = vpop.f32.mrb[0].mxu0
        %v1073 = vadd.f32 0.0, %v1072
        %v1074 = vpop.f32.mrb[0].mxu0
        %v1075 = vpop.f32.mrb[0].mxu0
        %v1076 = vadd.f32 0.0, %v1075
        %v1077 = vpop.f32.mrb[0].mxu0
        %1078 = vmatprep.mubr.bf16.mxu0 0
        %1079 = vmatmul.mubr.bf16.gmra.mrb[0].mxu0 %v913
        %v1080 = vpop.f32.mrb[0].mxu0
        %v1081 = vadd.f32 0.0, %v1080
        %v1082 = vpop.f32.mrb[0].mxu0
        %v1083 = vpop.f32.mrb[0].mxu0
        %v1084 = vadd.f32 0.0, %v1083
        %v1085 = vpop.f32.mrb[0].mxu0
        %1086 = vdwg.mxu0
        %v1087 = vadd.f32 %v748, %v953
        %v1088 = vadd.f32 %v751, %v956
        %v1089 = vadd.f32 %v756, %v961
        %v1090 = vadd.f32 %v759, %v964
        %v1091 = vadd.f32 %v764, %v969
        %v1092 = vadd.f32 %v767, %v972
        %v1093 = vadd.f32 %v772, %v977
        %v1094 = vadd.f32 %v775, %v980
        %v1095 = vadd.f32 %v780, %v985
        %v1096 = vadd.f32 %v783, %v988
        %v1097 = vadd.f32 %v788, %v993
        %v1098 = vadd.f32 %v791, %v996
        %v1099 = vadd.f32 %v796, %v1001
        %v1100 = vadd.f32 %v799, %v1004
        %v1101 = vadd.f32 %v804, %v1009
        %v1102 = vadd.f32 %v807, %v1012
        %v1103 = vadd.f32 %v812, %v1017
        %v1104 = vadd.f32 %v815, %v1020
        %v1105 = vadd.f32 %v820, %v1025
        %v1106 = vadd.f32 %v823, %v1028
        %v1107 = vadd.f32 %v828, %v1033
        %v1108 = vadd.f32 %v831, %v1036
        %v1109 = vadd.f32 %v836, %v1041
        %v1110 = vadd.f32 %v839, %v1044
        %v1111 = vadd.f32 %v844, %v1049
        %v1112 = vadd.f32 %v847, %v1052
        %v1113 = vadd.f32 %v852, %v1057
        %v1114 = vadd.f32 %v855, %v1060
        %v1115 = vadd.f32 %v860, %v1065
        %v1116 = vadd.f32 %v863, %v1068
        %v1117 = vadd.f32 %v868, %v1073
        %v1118 = vadd.f32 %v871, %v1076
        %v1119 = vadd.f32 %v876, %v1081
        %v1120 = vadd.f32 %v879, %v1084
        %s1121 = scalar_lea.vmem %s1, 24
        %v1122 = vld [vmem:[%s1121] sm:$0xf]
        %v1123 = vld [vmem:[%s1121 + $0x4] sm:$0x3]
        %vm1124 = vcmask 1046528
        %v1125 = vrot.slane %v283, 1
        %v1126 = vrot.slane %v284, 1
        %v1127 = vsel %vm1124, %v1125, %v1126
        %v1128 = vrot.slane %v285, 1
        %v1129 = vsel %vm1124, %v1126, %v1128
        %v1130 = vrot.slane %v286, 1
        %v1131 = vsel %vm1124, %v1128, %v1130
        %v1132 = vrot.slane %v287, 1
        %v1133 = vsel %vm1124, %v1130, %v1132
        %v1134 = vrot.slane %v288, 1
        %v1135 = vsel %vm1124, %v1132, %v1134
        %v1136 = vrot.slane %v289, 1
        %v1137 = vsel %vm1124, %v1134, %v1136
        %v1138 = vrot.slane %v290, 1
        %v1139 = vsel %vm1124, %v1136, %v1138
        %v1140 = vrot.slane %v291, 1
        %v1141 = vsel %vm1124, %v1138, %v1140
        %v1142 = vrot.slane %v292, 1
        %v1143 = vsel %vm1124, %v1140, %v1142
        %v1144 = vrot.slane %v293, 1
        %v1145 = vsel %vm1124, %v1142, %v1144
        %v1146 = vrot.slane %v294, 1
        %v1147 = vsel %vm1124, %v1144, %v1146
        %v1148 = vrot.slane %v295, 1
        %v1149 = vsel %vm1124, %v1146, %v1148
        %v1150 = vrot.slane %v296, 1
        %v1151 = vsel %vm1124, %v1148, %v1150
        %v1152 = vrot.slane %v297, 1
        %v1153 = vsel %vm1124, %v1150, %v1152
        %v1154 = vrot.slane %v298, 1
        %v1155 = vsel %vm1124, %v1152, %v1154
        %v1156 = vrot.slane %v889, 1
        %v1157 = vsel %vm1124, %v1154, %v1156
        %v1158 = vrot.slane %v890, 1
        %v1159 = vsel %vm1124, %v1156, %v1158
        %v1162 = vunpack.c.l.b16 %v1122
        %v1163 = vunpack.c.l.b16 %v1123
        %v1164 = vpack.c.b16 %v1163, %v1162
        %v1166 = vsel %vm446, %v1127, 0
        %v1169 = vsel %vm446, %v1129, 0
        %v1172 = vsel %vm446, %v1131, 0
        %v1175 = vsel %vm446, %v1133, 0
        %v1178 = vsel %vm446, %v1135, 0
        %v1181 = vsel %vm446, %v1137, 0
        %v1184 = vsel %vm446, %v1139, 0
        %v1187 = vsel %vm446, %v1141, 0
        %v1190 = vsel %vm446, %v1143, 0
        %v1193 = vsel %vm446, %v1145, 0
        %v1196 = vsel %vm446, %v1147, 0
        %v1199 = vsel %vm446, %v1149, 0
        %v1202 = vsel %vm446, %v1151, 0
        %v1205 = vsel %vm446, %v1153, 0
        %v1208 = vsel %vm446, %v1155, 0
        %v1211 = vsel %vm446, %v1157, 0
        %v1214 = vsel %vm446, %v1159, 0
        %v1217 = vsel %vm498, %v1164, 0
        %1219 = vmatprep.subr.bf16.mxu0 0
        %1220 = vmatpush1.bf16.msra.mxu0 %v1217
        %1221 = vmatprep.subr.bf16.mxu0 0
        %1222 = vmatpush1.bf16.msra.mxu0 0
        %1223 = vmatprep.subr.bf16.mxu0 0
        %1224 = vmatpush1.bf16.msra.mxu0 0
        %1225 = vmatprep.subr.bf16.mxu0 0
        %1226 = vmatpush1.bf16.msra.mxu0 0
        %1227 = vmatprep.subr.bf16.mxu0 0
        %1228 = vmatpush1.bf16.msra.mxu0 0
        %1229 = vmatprep.subr.bf16.mxu0 0
        %1230 = vmatpush1.bf16.msra.mxu0 0
        %1231 = vmatprep.subr.bf16.mxu0 0
        %1232 = vmatpush1.bf16.msra.mxu0 0
        %1233 = vmatprep.subr.bf16.mxu0 0
        %1234 = vmatpush1.bf16.msra.mxu0 0
        %1235 = vmatprep.subr.bf16.mxu0 0
        %1236 = vmatpush1.bf16.msra.mxu0 0
        %1237 = vmatprep.subr.bf16.mxu0 0
        %1238 = vmatpush1.bf16.msra.mxu0 0
        %1239 = vmatprep.subr.bf16.mxu0 0
        %1240 = vmatpush1.bf16.msra.mxu0 0
        %1241 = vmatprep.subr.bf16.mxu0 0
        %1242 = vmatpush1.bf16.msra.mxu0 0
        %1243 = vmatprep.subr.bf16.mxu0 0
        %1244 = vmatpush1.bf16.msra.mxu0 0
        %1245 = vmatprep.subr.bf16.mxu0 0
        %1246 = vmatpush1.bf16.msra.mxu0 0
        %1247 = vmatprep.subr.bf16.mxu0 0
        %1248 = vmatpush1.bf16.msra.mxu0 0
        %1249 = vmatprep.subr.bf16.mxu0 0
        %1250 = vmatpush1.bf16.msra.mxu0 0
        %1251 = vmatprep.mubr.bf16.mxu0 0
        %1252 = vmatmul.mubr.bf16.gmra.mrb[0].mxu0 %v1166
        %v1253 = vpop.f32.mrb[0].mxu0
        %v1254 = vadd.f32 0.0, %v1253
        %v1255 = vpop.f32.mrb[0].mxu0
        %v1256 = vpop.f32.mrb[0].mxu0
        %v1257 = vadd.f32 0.0, %v1256
        %v1258 = vpop.f32.mrb[0].mxu0
        %1259 = vmatprep.mubr.bf16.mxu0 0
        %1260 = vmatmul.mubr.bf16.gmra.mrb[0].mxu0 %v1169
        %v1261 = vpop.f32.mrb[0].mxu0
        %v1262 = vadd.f32 0.0, %v1261
        %v1263 = vpop.f32.mrb[0].mxu0
        %v1264 = vpop.f32.mrb[0].mxu0
        %v1265 = vadd.f32 0.0, %v1264
        %v1266 = vpop.f32.mrb[0].mxu0
        %1267 = vmatprep.mubr.bf16.mxu0 0
        %1268 = vmatmul.mubr.bf16.gmra.mrb[0].mxu0 %v1172
        %v1269 = vpop.f32.mrb[0].mxu0
        %v1270 = vadd.f32 0.0, %v1269
        %v1271 = vpop.f32.mrb[0].mxu0
        %v1272 = vpop.f32.mrb[0].mxu0
        %v1273 = vadd.f32 0.0, %v1272
        %v1274 = vpop.f32.mrb[0].mxu0
        %1275 = vmatprep.mubr.bf16.mxu0 0
        %1276 = vmatmul.mubr.bf16.gmra.mrb[0].mxu0 %v1175
        %v1277 = vpop.f32.mrb[0].mxu0
        %v1278 = vadd.f32 0.0, %v1277
        %v1279 = vpop.f32.mrb[0].mxu0
        %v1280 = vpop.f32.mrb[0].mxu0
        %v1281 = vadd.f32 0.0, %v1280
        %v1282 = vpop.f32.mrb[0].mxu0
        %1283 = vmatprep.mubr.bf16.mxu0 0
        %1284 = vmatmul.mubr.bf16.gmra.mrb[0].mxu0 %v1178
        %v1285 = vpop.f32.mrb[0].mxu0
        %v1286 = vadd.f32 0.0, %v1285
        %v1287 = vpop.f32.mrb[0].mxu0
        %v1288 = vpop.f32.mrb[0].mxu0
        %v1289 = vadd.f32 0.0, %v1288
        %v1290 = vpop.f32.mrb[0].mxu0
        %1291 = vmatprep.mubr.bf16.mxu0 0
        %1292 = vmatmul.mubr.bf16.gmra.mrb[0].mxu0 %v1181
        %v1293 = vpop.f32.mrb[0].mxu0
        %v1294 = vadd.f32 0.0, %v1293
        %v1295 = vpop.f32.mrb[0].mxu0
        %v1296 = vpop.f32.mrb[0].mxu0
        %v1297 = vadd.f32 0.0, %v1296
        %v1298 = vpop.f32.mrb[0].mxu0
        %1299 = vmatprep.mubr.bf16.mxu0 0
        %1300 = vmatmul.mubr.bf16.gmra.mrb[0].mxu0 %v1184
        %v1301 = vpop.f32.mrb[0].mxu0
        %v1302 = vadd.f32 0.0, %v1301
        %v1303 = vpop.f32.mrb[0].mxu0
        %v1304 = vpop.f32.mrb[0].mxu0
        %v1305 = vadd.f32 0.0, %v1304
        %v1306 = vpop.f32.mrb[0].mxu0
        %1307 = vmatprep.mubr.bf16.mxu0 0
        %1308 = vmatmul.mubr.bf16.gmra.mrb[0].mxu0 %v1187
        %v1309 = vpop.f32.mrb[0].mxu0
        %v1310 = vadd.f32 0.0, %v1309
        %v1311 = vpop.f32.mrb[0].mxu0
        %v1312 = vpop.f32.mrb[0].mxu0
        %v1313 = vadd.f32 0.0, %v1312
        %v1314 = vpop.f32.mrb[0].mxu0
        %1315 = vmatprep.mubr.bf16.mxu0 0
        %1316 = vmatmul.mubr.bf16.gmra.mrb[0].mxu0 %v1190
        %v1317 = vpop.f32.mrb[0].mxu0
        %v1318 = vadd.f32 0.0, %v1317
        %v1319 = vpop.f32.mrb[0].mxu0
        %v1320 = vpop.f32.mrb[0].mxu0
        %v1321 = vadd.f32 0.0, %v1320
        %v1322 = vpop.f32.mrb[0].mxu0
        %1323 = vmatprep.mubr.bf16.mxu0 0
        %1324 = vmatmul.mubr.bf16.gmra.mrb[0].mxu0 %v1193
        %v1325 = vpop.f32.mrb[0].mxu0
        %v1326 = vadd.f32 0.0, %v1325
        %v1327 = vpop.f32.mrb[0].mxu0
        %v1328 = vpop.f32.mrb[0].mxu0
        %v1329 = vadd.f32 0.0, %v1328
        %v1330 = vpop.f32.mrb[0].mxu0
        %1331 = vmatprep.mubr.bf16.mxu0 0
        %1332 = vmatmul.mubr.bf16.gmra.mrb[0].mxu0 %v1196
        %v1333 = vpop.f32.mrb[0].mxu0
        %v1334 = vadd.f32 0.0, %v1333
        %v1335 = vpop.f32.mrb[0].mxu0
        %v1336 = vpop.f32.mrb[0].mxu0
        %v1337 = vadd.f32 0.0, %v1336
        %v1338 = vpop.f32.mrb[0].mxu0
        %1339 = vmatprep.mubr.bf16.mxu0 0
        %1340 = vmatmul.mubr.bf16.gmra.mrb[0].mxu0 %v1199
        %v1341 = vpop.f32.mrb[0].mxu0
        %v1342 = vadd.f32 0.0, %v1341
        %v1343 = vpop.f32.mrb[0].mxu0
        %v1344 = vpop.f32.mrb[0].mxu0
        %v1345 = vadd.f32 0.0, %v1344
        %v1346 = vpop.f32.mrb[0].mxu0
        %1347 = vmatprep.mubr.bf16.mxu0 0
        %1348 = vmatmul.mubr.bf16.gmra.mrb[0].mxu0 %v1202
        %v1349 = vpop.f32.mrb[0].mxu0
        %v1350 = vadd.f32 0.0, %v1349
        %v1351 = vpop.f32.mrb[0].mxu0
        %v1352 = vpop.f32.mrb[0].mxu0
        %v1353 = vadd.f32 0.0, %v1352
        %v1354 = vpop.f32.mrb[0].mxu0
        %1355 = vmatprep.mubr.bf16.mxu0 0
        %1356 = vmatmul.mubr.bf16.gmra.mrb[0].mxu0 %v1205
        %v1357 = vpop.f32.mrb[0].mxu0
        %v1358 = vadd.f32 0.0, %v1357
        %v1359 = vpop.f32.mrb[0].mxu0
        %v1360 = vpop.f32.mrb[0].mxu0
        %v1361 = vadd.f32 0.0, %v1360
        %v1362 = vpop.f32.mrb[0].mxu0
        %1363 = vmatprep.mubr.bf16.mxu0 0
        %1364 = vmatmul.mubr.bf16.gmra.mrb[0].mxu0 %v1208
        %v1365 = vpop.f32.mrb[0].mxu0
        %v1366 = vadd.f32 0.0, %v1365
        %v1367 = vpop.f32.mrb[0].mxu0
        %v1368 = vpop.f32.mrb[0].mxu0
        %v1369 = vadd.f32 0.0, %v1368
        %v1370 = vpop.f32.mrb[0].mxu0
        %1371 = vmatprep.mubr.bf16.mxu0 0
        %1372 = vmatmul.mubr.bf16.gmra.mrb[0].mxu0 %v1211
        %v1373 = vpop.f32.mrb[0].mxu0
        %v1374 = vadd.f32 0.0, %v1373
        %v1375 = vpop.f32.mrb[0].mxu0
        %v1376 = vpop.f32.mrb[0].mxu0
        %v1377 = vadd.f32 0.0, %v1376
        %v1378 = vpop.f32.mrb[0].mxu0
        %1379 = vmatprep.mubr.bf16.mxu0 0
        %1380 = vmatmul.mubr.bf16.gmra.mrb[0].mxu0 %v1214
        %v1381 = vpop.f32.mrb[0].mxu0
        %v1382 = vadd.f32 0.0, %v1381
        %v1383 = vpop.f32.mrb[0].mxu0
        %v1384 = vpop.f32.mrb[0].mxu0
        %v1385 = vadd.f32 0.0, %v1384
        %v1386 = vpop.f32.mrb[0].mxu0
        %1387 = vdwg.mxu0
        %v1388 = vadd.f32 %v1087, %v1254
        %v1389 = vadd.f32 %v1088, %v1257
        %v1390 = vadd.f32 %v1089, %v1262
        %v1391 = vadd.f32 %v1090, %v1265
        %v1392 = vadd.f32 %v1091, %v1270
        %v1393 = vadd.f32 %v1092, %v1273
        %v1394 = vadd.f32 %v1093, %v1278
        %v1395 = vadd.f32 %v1094, %v1281
        %v1396 = vadd.f32 %v1095, %v1286
        %v1397 = vadd.f32 %v1096, %v1289
        %v1398 = vadd.f32 %v1097, %v1294
        %v1399 = vadd.f32 %v1098, %v1297
        %v1400 = vadd.f32 %v1099, %v1302
        %v1401 = vadd.f32 %v1100, %v1305
        %v1402 = vadd.f32 %v1101, %v1310
        %v1403 = vadd.f32 %v1102, %v1313
        %v1404 = vadd.f32 %v1103, %v1318
        %v1405 = vadd.f32 %v1104, %v1321
        %v1406 = vadd.f32 %v1105, %v1326
        %v1407 = vadd.f32 %v1106, %v1329
        %v1408 = vadd.f32 %v1107, %v1334
        %v1409 = vadd.f32 %v1108, %v1337
        %v1410 = vadd.f32 %v1109, %v1342
        %v1411 = vadd.f32 %v1110, %v1345
        %v1412 = vadd.f32 %v1111, %v1350
        %v1413 = vadd.f32 %v1112, %v1353
        %v1414 = vadd.f32 %v1113, %v1358
        %v1415 = vadd.f32 %v1114, %v1361
        %v1416 = vadd.f32 %v1115, %v1366
        %v1417 = vadd.f32 %v1116, %v1369
        %v1418 = vadd.f32 %v1117, %v1374
        %v1419 = vadd.f32 %v1118, %v1377
        %v1420 = vadd.f32 %v1119, %v1382
        %v1421 = vadd.f32 %v1120, %v1385
        %v1422 = vld [vmem:[%s2] sm:$0x1]
        %v1424 = vlaneseq
        %v1425 = vshrl.u32 %v1424, 7
        %v1426 = vsub.s32 0, %v1425
        %v1427 = vrot.slane %v1422, %v1426
        %v1429 = vadd.f32 %v1388, %v1427
        %v1430 = vadd.f32 %v1389, %v1427
        %v1431 = vadd.f32 %v1390, %v1427
        %v1432 = vadd.f32 %v1391, %v1427
        %v1433 = vadd.f32 %v1392, %v1427
        %v1434 = vadd.f32 %v1393, %v1427
        %v1435 = vadd.f32 %v1394, %v1427
        %v1436 = vadd.f32 %v1395, %v1427
        %v1437 = vadd.f32 %v1396, %v1427
        %v1438 = vadd.f32 %v1397, %v1427
        %v1439 = vadd.f32 %v1398, %v1427
        %v1440 = vadd.f32 %v1399, %v1427
        %v1441 = vadd.f32 %v1400, %v1427
        %v1442 = vadd.f32 %v1401, %v1427
        %v1443 = vadd.f32 %v1402, %v1427
        %v1444 = vadd.f32 %v1403, %v1427
        %v1445 = vadd.f32 %v1404, %v1427
        %v1446 = vadd.f32 %v1405, %v1427
        %v1447 = vadd.f32 %v1406, %v1427
        %v1448 = vadd.f32 %v1407, %v1427
        %v1449 = vadd.f32 %v1408, %v1427
        %v1450 = vadd.f32 %v1409, %v1427
        %v1451 = vadd.f32 %v1410, %v1427
        %v1452 = vadd.f32 %v1411, %v1427
        %v1453 = vadd.f32 %v1412, %v1427
        %v1454 = vadd.f32 %v1413, %v1427
        %v1455 = vadd.f32 %v1414, %v1427
        %v1456 = vadd.f32 %v1415, %v1427
        %v1457 = vadd.f32 %v1416, %v1427
        %v1458 = vadd.f32 %v1417, %v1427
        %v1459 = vadd.f32 %v1418, %v1427
        %v1460 = vadd.f32 %v1419, %v1427
        %v1461 = vadd.f32 %v1420, %v1427
        %v1462 = vadd.f32 %v1421, %v1427
        %v1463 = vmax.f32 %v1429, 0.0
        %v1464 = vmax.f32 %v1430, 0.0
        %v1465 = vmax.f32 %v1431, 0.0
        %v1466 = vmax.f32 %v1432, 0.0
        %v1467 = vmax.f32 %v1433, 0.0
        %v1468 = vmax.f32 %v1434, 0.0
        %v1469 = vmax.f32 %v1435, 0.0
        %v1470 = vmax.f32 %v1436, 0.0
        %v1471 = vmax.f32 %v1437, 0.0
        %v1472 = vmax.f32 %v1438, 0.0
        %v1473 = vmax.f32 %v1439, 0.0
        %v1474 = vmax.f32 %v1440, 0.0
        %v1475 = vmax.f32 %v1441, 0.0
        %v1476 = vmax.f32 %v1442, 0.0
        %v1477 = vmax.f32 %v1443, 0.0
        %v1478 = vmax.f32 %v1444, 0.0
        %v1479 = vmax.f32 %v1445, 0.0
        %v1480 = vmax.f32 %v1446, 0.0
        %v1481 = vmax.f32 %v1447, 0.0
        %v1482 = vmax.f32 %v1448, 0.0
        %v1483 = vmax.f32 %v1449, 0.0
        %v1484 = vmax.f32 %v1450, 0.0
        %v1485 = vmax.f32 %v1451, 0.0
        %v1486 = vmax.f32 %v1452, 0.0
        %v1487 = vmax.f32 %v1453, 0.0
        %v1488 = vmax.f32 %v1454, 0.0
        %v1489 = vmax.f32 %v1455, 0.0
        %v1490 = vmax.f32 %v1456, 0.0
        %v1491 = vmax.f32 %v1457, 0.0
        %v1492 = vmax.f32 %v1458, 0.0
        %v1493 = vmax.f32 %v1459, 0.0
        %v1494 = vmax.f32 %v1460, 0.0
        %v1495 = vmax.f32 %v1461, 0.0
        %v1496 = vmax.f32 %v1462, 0.0
        %v1497 = vmin.f32 %v1463, 6.0
        %v1498 = vmin.f32 %v1464, 6.0
        %v1499 = vmin.f32 %v1465, 6.0
        %v1500 = vmin.f32 %v1466, 6.0
        %v1501 = vmin.f32 %v1467, 6.0
        %v1502 = vmin.f32 %v1468, 6.0
        %v1503 = vmin.f32 %v1469, 6.0
        %v1504 = vmin.f32 %v1470, 6.0
        %v1505 = vmin.f32 %v1471, 6.0
        %v1506 = vmin.f32 %v1472, 6.0
        %v1507 = vmin.f32 %v1473, 6.0
        %v1508 = vmin.f32 %v1474, 6.0
        %v1509 = vmin.f32 %v1475, 6.0
        %v1510 = vmin.f32 %v1476, 6.0
        %v1511 = vmin.f32 %v1477, 6.0
        %v1512 = vmin.f32 %v1478, 6.0
        %v1513 = vmin.f32 %v1479, 6.0
        %v1514 = vmin.f32 %v1480, 6.0
        %v1515 = vmin.f32 %v1481, 6.0
        %v1516 = vmin.f32 %v1482, 6.0
        %v1517 = vmin.f32 %v1483, 6.0
        %v1518 = vmin.f32 %v1484, 6.0
        %v1519 = vmin.f32 %v1485, 6.0
        %v1520 = vmin.f32 %v1486, 6.0
        %v1521 = vmin.f32 %v1487, 6.0
        %v1522 = vmin.f32 %v1488, 6.0
        %v1523 = vmin.f32 %v1489, 6.0
        %v1524 = vmin.f32 %v1490, 6.0
        %v1525 = vmin.f32 %v1491, 6.0
        %v1526 = vmin.f32 %v1492, 6.0
        %v1527 = vmin.f32 %v1493, 6.0
        %v1528 = vmin.f32 %v1494, 6.0
        %v1529 = vmin.f32 %v1495, 6.0
        %v1530 = vmin.f32 %v1496, 6.0
        %v1531 = vpack.c.bf16 %v1498, %v1497
        %v1532 = vpack.c.bf16 %v1500, %v1499
        %v1533 = vpack.c.bf16 %v1502, %v1501
        %v1534 = vpack.c.bf16 %v1504, %v1503
        %v1535 = vpack.c.bf16 %v1506, %v1505
        %v1536 = vpack.c.bf16 %v1508, %v1507
        %v1537 = vpack.c.bf16 %v1510, %v1509
        %v1538 = vpack.c.bf16 %v1512, %v1511
        %v1539 = vpack.c.bf16 %v1514, %v1513
        %v1540 = vpack.c.bf16 %v1516, %v1515
        %v1541 = vpack.c.bf16 %v1518, %v1517
        %v1542 = vpack.c.bf16 %v1520, %v1519
        %v1543 = vpack.c.bf16 %v1522, %v1521
        %v1544 = vpack.c.bf16 %v1524, %v1523
        %v1545 = vpack.c.bf16 %v1526, %v1525
        %v1546 = vpack.c.bf16 %v1528, %v1527
        %v1547 = vpack.c.bf16 %v1530, %v1529
        %v1565 = vunpack.c.l.b16 %v1531
        %v1566 = vunpack.c.h.b16 %v1531
        %v1567 = vunpack.c.l.b16 %v1532
        %v1568 = vunpack.c.h.b16 %v1532
        %v1569 = vunpack.c.l.b16 %v1533
        %v1570 = vunpack.c.h.b16 %v1533
        %v1571 = vunpack.c.l.b16 %v1534
        %v1572 = vunpack.c.h.b16 %v1534
        %v1573 = vunpack.c.l.b16 %v1535
        %v1574 = vunpack.c.h.b16 %v1535
        %v1575 = vunpack.c.l.b16 %v1536
        %v1576 = vunpack.c.h.b16 %v1536
        %v1577 = vunpack.c.l.b16 %v1537
        %v1578 = vunpack.c.h.b16 %v1537
        %v1579 = vunpack.c.l.b16 %v1538
        %v1580 = vunpack.c.h.b16 %v1538
        %v1581 = vunpack.c.l.b16 %v1539
        %v1582 = vunpack.c.h.b16 %v1539
        %v1583 = vunpack.c.l.b16 %v1540
        %v1584 = vunpack.c.h.b16 %v1540
        %v1585 = vunpack.c.l.b16 %v1541
        %v1586 = vunpack.c.h.b16 %v1541
        %v1587 = vunpack.c.l.b16 %v1542
        %v1588 = vunpack.c.h.b16 %v1542
        %v1589 = vunpack.c.l.b16 %v1543
        %v1590 = vunpack.c.h.b16 %v1543
        %v1591 = vunpack.c.l.b16 %v1544
        %v1592 = vunpack.c.h.b16 %v1544
        %v1593 = vunpack.c.l.b16 %v1545
        %v1594 = vunpack.c.h.b16 %v1545
        %v1595 = vunpack.c.l.b16 %v1546
        %v1596 = vunpack.c.h.b16 %v1546
        %v1597 = vunpack.c.l.b16 %v1547
        %v1598 = vunpack.c.h.b16 %v1547
        %v1599 = vpack.c.b16 %v1565, %v1565
        %v1600 = vpack.c.b16 %v1566, %v1566
        %v1601 = vpack.c.b16 %v1567, %v1567
        %v1602 = vpack.c.b16 %v1568, %v1568
        %v1603 = vpack.c.b16 %v1569, %v1569
        %v1604 = vpack.c.b16 %v1570, %v1570
        %v1605 = vpack.c.b16 %v1571, %v1571
        %v1606 = vpack.c.b16 %v1572, %v1572
        %v1607 = vpack.c.b16 %v1573, %v1573
        %v1608 = vpack.c.b16 %v1574, %v1574
        %v1609 = vpack.c.b16 %v1575, %v1575
        %v1610 = vpack.c.b16 %v1576, %v1576
        %v1611 = vpack.c.b16 %v1577, %v1577
        %v1612 = vpack.c.b16 %v1578, %v1578
        %v1613 = vpack.c.b16 %v1579, %v1579
        %v1614 = vpack.c.b16 %v1580, %v1580
        %v1615 = vpack.c.b16 %v1581, %v1581
        %v1616 = vpack.c.b16 %v1582, %v1582
        %v1617 = vpack.c.b16 %v1583, %v1583
        %v1618 = vpack.c.b16 %v1584, %v1584
        %v1619 = vpack.c.b16 %v1585, %v1585
        %v1620 = vpack.c.b16 %v1586, %v1586
        %v1621 = vpack.c.b16 %v1587, %v1587
        %v1622 = vpack.c.b16 %v1588, %v1588
        %v1623 = vpack.c.b16 %v1589, %v1589
        %v1624 = vpack.c.b16 %v1590, %v1590
        %v1625 = vpack.c.b16 %v1591, %v1591
        %v1626 = vpack.c.b16 %v1592, %v1592
        %v1627 = vpack.c.b16 %v1593, %v1593
        %v1628 = vpack.c.b16 %v1594, %v1594
        %v1629 = vpack.c.b16 %v1595, %v1595
        %v1630 = vpack.c.b16 %v1596, %v1596
        %v1631 = vpack.c.b16 %v1597, %v1597
        %v1632 = vpack.c.b16 %v1598, %v1598
        %1667 = vst [vmem:[%s163] sm:$0xf] %v1599
        %1668 = vst [vmem:[%s163 + $0x4] sm:$0xf] %v1600
        %1669 = vst [vmem:[%s163 + $0x8] sm:$0xf] %v1601
        %1670 = vst [vmem:[%s163 + $0xc] sm:$0xf] %v1602
        %1671 = vst [vmem:[%s163 + $0x10] sm:$0xf] %v1603
        %1672 = vst [vmem:[%s163 + $0x14] sm:$0xf] %v1604
        %1673 = vst [vmem:[%s163 + $0x18] sm:$0xf] %v1605
        %1674 = vst [vmem:[%s163 + $0x1c] sm:$0xf] %v1606
        %1675 = vst [vmem:[%s163 + $0x20] sm:$0xf] %v1607
        %1676 = vst [vmem:[%s163 + $0x24] sm:$0xf] %v1608
        %1677 = vst [vmem:[%s163 + $0x28] sm:$0xf] %v1609
        %1678 = vst [vmem:[%s163 + $0x2c] sm:$0xf] %v1610
        %1679 = vst [vmem:[%s163 + $0x30] sm:$0xf] %v1611
        %1680 = vst [vmem:[%s163 + $0x34] sm:$0xf] %v1612
        %1681 = vst [vmem:[%s163 + $0x38] sm:$0xf] %v1613
        %1682 = vst [vmem:[%s163 + $0x3c] sm:$0xf] %v1614
        %1683 = vst [vmem:[%s163 + $0x40] sm:$0xf] %v1615
        %1684 = vst [vmem:[%s163 + $0x44] sm:$0xf] %v1616
        %1685 = vst [vmem:[%s163 + $0x48] sm:$0xf] %v1617
        %1686 = vst [vmem:[%s163 + $0x4c] sm:$0xf] %v1618
        %1687 = vst [vmem:[%s163 + $0x50] sm:$0xf] %v1619
        %1688 = vst [vmem:[%s163 + $0x54] sm:$0xf] %v1620
        %1689 = vst [vmem:[%s163 + $0x58] sm:$0xf] %v1621
        %1690 = vst [vmem:[%s163 + $0x5c] sm:$0xf] %v1622
        %1691 = vst [vmem:[%s163 + $0x60] sm:$0xf] %v1623
        %1692 = vst [vmem:[%s163 + $0x64] sm:$0xf] %v1624
        %1693 = vst [vmem:[%s163 + $0x68] sm:$0xf] %v1625
        %1694 = vst [vmem:[%s163 + $0x6c] sm:$0xf] %v1626
        %1695 = vst [vmem:[%s163 + $0x70] sm:$0xf] %v1627
        %1696 = vst [vmem:[%s163 + $0x74] sm:$0xf] %v1628
        %1697 = vst [vmem:[%s163 + $0x78] sm:$0xf] %v1629
        %1698 = vst [vmem:[%s163 + $0x7c] sm:$0xf] %v1630
        %1699 = vst [vmem:[%s163 + $0x80] sm:$0xf] %v1631
        %1700 = vst [vmem:[%s163 + $0x84] sm:$0xf] %v1632
        %s1701 = sand.u32 %s93, 1
        %s1702 = scalar_lea.sflag [#allocation3], %s1701
        %s1703 = sand.u32 %s93, 1
        %s1704 = smul.addr %s1703, 136
        %s1705 = scalar_lea.vmem [#allocation2], %s1704
        // Predicated region
        $region33: #{tpu_custom_call.1} parent=31 // pred_check
          %p1706 = pneg %p103
        $region34: #{tpu_custom_call.1} parent=31 // pred_check_branch
          %1708 = sbr.rel (%p1706) target = $region36
        $region35: #{tpu_custom_call.1} parent=31 // pred_region
          %s1710 = ssub.s32 2176, 2176
          %1711 = vsyncadd %s1702, %s1710
          %s1712 = smul.addr %s17, 34
          %s1713 = smul.addr %s1712, 64
          %s1714 = scalar_lea.hbm %s3, %s1713
          %s1715 = sshll.u32 %s1705, 4
          %s1716 = int_to_ptr.vmem [resolvable:$true] %s1715
          %1721 = dma.vmem_to_hbm [thread:$0]  %s1716, 2176, %s1714, %s1702, 64, 64, 4
        $region36: #{tpu_custom_call.1} parent=31 // pred_fallthru
          _
      $region32: #{tpu_custom_call.1} parent=5 // pred_fallthru
        _
      %p1722 = scmp.le.s32.totalorder 2, %s12
      // Predicated region
      $region37: #{tpu_custom_call.1} parent=5 // pred_check
        %p1723 = pneg %p1722
      $region38: #{tpu_custom_call.1} parent=5 // pred_check_branch
        %1725 = sbr.rel (%p1723) target = $region40
      $region39: #{tpu_custom_call.1} parent=5 // pred_region
        %s1726 = ssub.s32 %s12, 2
        // Predicated region
        $region41: #{tpu_custom_call.1} parent=39 // pred_check
          %p1727 = pneg %p109
        $region42: #{tpu_custom_call.1} parent=39 // pred_check_branch
          %1729 = sbr.rel (%p1727) target = $region44
        $region43: #{tpu_custom_call.1} parent=39 // pred_region
          %s1730 = sand.u32 %s94, 1
          %s1731 = scalar_lea.sflag [#allocation3], %s1730
          %s1732 = sand.u32 %s94, 1
          %s1733 = smul.addr %s1732, 136
          %s1734 = scalar_lea.vmem [#allocation2], %s1733
          %1735 = dma.done %s1731, 2176
        $region44: #{tpu_custom_call.1} parent=39 // pred_fallthru
          _
      $region40: #{tpu_custom_call.1} parent=5 // pred_fallthru
        _
    $region6: #{tpu_custom_call.1} parent=1 // loop_footer
      %s16 = sadd.s32 1, %s12
    $region7: #{tpu_custom_call.1} parent=1 // loop_footer_branch
      %11 = sbr.rel target = $region3
    $region8: #{tpu_custom_call.1} parent=1 // loop_exit
      _
    %1736 = vsyncpa [#allocation3], 1
    %s1737 = scalar_lea.sflag [#allocation3], 1
    %1738 = vsyncpa %s1737, 1

</llo_original>
